<compile_context>
chip_gen: v5e
topology: v5e:2x2
jax: 0.10.0
libtpu: 0.0.40
codegen_flags: <defaults>
</compile_context>

<pallas_src>
import functools

import jax
import jax.numpy as jnp
import numpy as np
from jax.experimental import pallas as pl
from jax.experimental.pallas import tpu as pltpu


# ----------------------------------------------------------------------------
# Hardware / VMEM budget helpers (generation aware)
# ----------------------------------------------------------------------------
def _hw_info():
    kind = ""
    try:
        kind = jax.devices()[0].device_kind.lower()
    except Exception:
        pass
    is_v7 = "v7" in kind
    is_v5_or_older = any(t in kind for t in ("v2", "v3", "v4", "v5"))
    vmem_cap = 0
    try:
        vmem_cap = int(pltpu.get_tpu_info().vmem_capacity_bytes)
    except Exception:
        vmem_cap = 0
    if vmem_cap <= 0:
        vmem_cap = (64 << 20) if is_v7 else (128 << 20)
    return is_v7, is_v5_or_older, vmem_cap


def _budgets(vmem_cap):
    # v7x: 64 MiB/TC -> 48 MiB limit; v5e/v6e: 128 MiB -> 96 MiB limit.
    vmem_limit = min(int(0.75 * vmem_cap), 96 << 20)
    matrix_budget = min(vmem_cap // 16, 8 << 20)           # per DFT matrix
    # Conservative: leave room as if the matrices were still double-buffered
    # even though we request single buffering for them.
    tile_budget = min(48 << 20, vmem_limit - 4 * matrix_budget - (4 << 20))
    tile_budget = max(tile_budget, 8 << 20)
    return matrix_budget, tile_budget, vmem_limit


# ----------------------------------------------------------------------------
# DFT matrices (norm='ortho'), block-diagonal over a fold of g rows of H
# ----------------------------------------------------------------------------
def _rfft_mats(n: int, g: int, dtype):
    """real = x @ Cr, imag = x @ Ci for x of length n (per diagonal block)."""
    f = n // 2 + 1
    nn = np.arange(n)[:, None].astype(np.float64)
    kk = np.arange(f)[None, :].astype(np.float64)
    ang = 2.0 * np.pi * nn * kk / n
    s = 1.0 / np.sqrt(n)
    cr = np.cos(ang) * s                      # (n, f)
    ci = -np.sin(ang) * s                     # (n, f)
    eye = np.eye(g, dtype=np.float64)
    return (jnp.asarray(np.kron(eye, cr), dtype),     # (g*n, g*f)
            jnp.asarray(np.kron(eye, ci), dtype))


def _irfft_mats(f: int, g: int, dtype):
    """x = Xr @ Ar + Xi @ Ai, output length n = 2*(f-1) (torch.irfft default)."""
    n = 2 * (f - 1)
    kk = np.arange(f)[:, None].astype(np.float64)
    nn = np.arange(n)[None, :].astype(np.float64)
    ang = 2.0 * np.pi * kk * nn / n
    # DC and Nyquist bins appear once; interior bins twice (hermitian fold).
    w = np.where((np.arange(f) == 0) | (np.arange(f) == f - 1), 1.0, 2.0)[:, None]
    s = 1.0 / np.sqrt(n)
    ar = w * np.cos(ang) * s                  # (f, n)
    ai = -w * np.sin(ang) * s                 # (f, n) (rows 0, f-1 are zero)
    eye = np.eye(g, dtype=np.float64)
    return (jnp.asarray(np.kron(eye, ar), dtype),     # (g*f, g*n)
            jnp.asarray(np.kron(eye, ai), dtype))


# ----------------------------------------------------------------------------
# Tiling heuristics
# ----------------------------------------------------------------------------
def _pick_fold(h: int, in_w: int, out_w: int, matrix_budget: int,
               mat_itemsize: int, lane_target: int) -> int:
    """Fold factor g (divides h): block-diagonal DFT over g rows of H so the
    output last dim is lane-dense (>= lane_target) while keeping the
    (g*in_w, g*out_w) DFT matrices inside the VMEM budget.  Smallest such g is
    picked so the g-fold zero-FLOP inflation stays minimal."""
    divisors = [g for g in range(1, h + 1) if h % g == 0]
    fitting = [g for g in divisors
               if (g * in_w) * (g * out_w) * mat_itemsize <= matrix_budget]
    if not fitting:
        # TODO(synk): for very large W/F the full DFT matrices exceed the VMEM
        # budget even at g=1; those shapes would need an extra grid axis tiling
        # the frequency dimension of the DFT matrices.
        return 1
    for target in (lane_target, 128):
        dense = [g for g in fitting if g * out_w >= target]
        if dense:
            return dense[0]
    return fitting[-1]


def _pick_tm(batch: int, rows: int, stream_row_elems: int, acc_row_elems: int,
             itemsize: int, tile_budget: int, is_v7: bool) -> int:
    """Largest row tile (multiple of 8, or == rows) such that the
    double-buffered streamed tiles (at the real dtype size) plus the f32
    in-kernel intermediates fit the tile budget."""
    per_row = stream_row_elems * itemsize * 2 + acc_row_elems * 4
    cap = tile_budget // max(per_row, 1)
    cap = max(8, min(4096, (cap // 8) * 8))
    tm = rows if rows <= cap else cap
    # Only v7x has 2 TensorCores; expose >=2 parallel grid steps there when the
    # batch alone does not provide them.  On v5e/v6e a split would only add a
    # serial grid step (+~0.35us) with no parallelism gain.
    if is_v7 and batch == 1 and tm == rows and rows >= 16:
        tm = max(8, ((rows // 2 + 7) // 8) * 8)
    return tm


def _const_spec(shape, single_buffer: bool):
    """BlockSpec for the DFT matrices: constant block index (fetched once);
    optionally single-buffered to halve their VMEM footprint."""
    idx = lambda bi, i: (0, 0)
    if single_buffer and hasattr(pl, "Buffered"):
        try:
            return pl.BlockSpec(shape, idx, pipeline_mode=pl.Buffered(1))
        except TypeError:
            pass
    return pl.BlockSpec(shape, idx)


# ----------------------------------------------------------------------------
# Pallas kernels (matmul hot path)
# ----------------------------------------------------------------------------
def _rfft_kernel(x_ref, cr_ref, ci_ref, o_ref, *, compute_dtype):
    # x_ref : (1, tm, g*W)   o_ref : (1, 2, tm, g*F)  -- [.,0]=real, [.,1]=imag
    x = x_ref[0, :, :].astype(compute_dtype)          # no-op when dtype matches
    real = jnp.dot(x, cr_ref[...], preferred_element_type=jnp.float32)
    imag = jnp.dot(x, ci_ref[...], preferred_element_type=jnp.float32)
    o_ref[0, 0, :, :] = real.astype(o_ref.dtype)
    o_ref[0, 1, :, :] = imag.astype(o_ref.dtype)
    # TODO(synk): on v5e the two dots could be fused via a column-concatenated
    # [Cr|Ci] RHS padded to a 128-lane multiple (halves vmatmul issue count).


def _irfft_kernel(x_ref, ar_ref, ai_ref, o_ref, *, compute_dtype):
    # x_ref : (1, 2, tm, g*F)   o_ref : (1, tm, g*N)
    xr = x_ref[0, 0, :, :].astype(compute_dtype)
    xi = x_ref[0, 1, :, :].astype(compute_dtype)
    acc = jnp.dot(xr, ar_ref[...], preferred_element_type=jnp.float32)
    acc = acc + jnp.dot(xi, ai_ref[...], preferred_element_type=jnp.float32)
    o_ref[0, :, :] = acc.astype(o_ref.dtype)


# ----------------------------------------------------------------------------
# Wrapper: FeatureConversion.forward
# ----------------------------------------------------------------------------
@functools.partial(jax.jit,
                   static_argnames=("channels", "inverse", "single_buffer"))
def _feature_conversion_impl(x, *, channels: int, inverse: bool,
                             single_buffer: bool):
    is_v7, is_v5, vmem_cap = _hw_info()
    matrix_budget, tile_budget, vmem_limit = _budgets(vmem_cap)

    # bf16 inputs stay bf16 on the MXU (f32 accumulation); everything else
    # computes in f32, matching the module's .float() cast.
    compute_dtype = jnp.bfloat16 if x.dtype == jnp.bfloat16 else jnp.float32
    mat_itemsize = jnp.dtype(compute_dtype).itemsize
    in_itemsize = x.dtype.itemsize
    # 256-wide MXU / lane-denser stores on v6e/v7x when the kernel stays
    # mem-bound (bf16 LHS); keep 128 on v5e to bound the g-fold FLOP waste.
    lane_target = 256 if (compute_dtype == jnp.bfloat16 and not is_v5) else 128

    compiler_params = pltpu.CompilerParams(
        dimension_semantics=("parallel", "parallel"),
        vmem_limit_bytes=vmem_limit,
    )

    if inverse:
        b, _, h, f = x.shape
        half = channels // 2
        n_out = 2 * (f - 1)        # torch.fft.irfft default output length
        g = _pick_fold(h, f, n_out, matrix_budget, mat_itemsize, lane_target)
        rows = half * h // g

        # (B, 2C', H, F) -> (B, 2, C', H, F) -> (B, 2, C'*H/g, g*F)  (free)
        x2 = x.reshape(b, 2, half, h, f).reshape(b, 2, rows, g * f)
        ar, ai = _irfft_mats(f, g, compute_dtype)        # (g*F, g*N) each

        tm = _pick_tm(b, rows, 2 * g * f + g * n_out, 2 * g * f + g * n_out,
                      in_itemsize, tile_budget, is_v7)
        grid = (b, pl.cdiv(rows, tm))

        out = pl.pallas_call(
            functools.partial(_irfft_kernel, compute_dtype=compute_dtype),
            out_shape=jax.ShapeDtypeStruct((b, rows, g * n_out), x.dtype),
            grid_spec=pltpu.PrefetchScalarGridSpec(
                num_scalar_prefetch=0,
                grid=grid,
                in_specs=[
                    pl.BlockSpec((1, 2, tm, g * f), lambda bi, i: (bi, 0, i, 0)),
                    _const_spec((g * f, g * n_out), single_buffer),
                    _const_spec((g * f, g * n_out), single_buffer),
                ],
                out_specs=pl.BlockSpec((1, tm, g * n_out),
                                       lambda bi, i: (bi, i, 0)),
            ),
            compiler_params=compiler_params,
        )(x2, ar, ai)

        # (B, C'*H/g, g*N) -> (B, C', H, N)  (free reshape)
        return out.reshape(b, half, h // g, g, n_out).reshape(b, half, h, n_out)

    else:
        b, c, h, w = x.shape
        f = w // 2 + 1
        g = _pick_fold(h, w, f, matrix_budget, mat_itemsize, lane_target)
        rows = c * h // g

        # (B, C, H, W) -> (B, C*H/g, g*W)  (free)
        x2 = x.reshape(b, rows, g * w)
        cr, ci = _rfft_mats(w, g, compute_dtype)         # (g*W, g*F) each

        tm = _pick_tm(b, rows, g * w + 2 * g * f, g * w + 2 * g * f,
                      in_itemsize, tile_budget, is_v7)
        grid = (b, pl.cdiv(rows, tm))

        out = pl.pallas_call(
            functools.partial(_rfft_kernel, compute_dtype=compute_dtype),
            out_shape=jax.ShapeDtypeStruct((b, 2, rows, g * f), x.dtype),
            grid_spec=pltpu.PrefetchScalarGridSpec(
                num_scalar_prefetch=0,
                grid=grid,
                in_specs=[
                    pl.BlockSpec((1, tm, g * w), lambda bi, i: (bi, i, 0)),
                    _const_spec((g * w, g * f), single_buffer),
                    _const_spec((g * w, g * f), single_buffer),
                ],
                out_specs=pl.BlockSpec((1, 2, tm, g * f),
                                       lambda bi, i: (bi, 0, i, 0)),
            ),
            compiler_params=compiler_params,
        )(x2, cr, ci)

        # (B, 2, C*H/g, g*F) -> (B, 2C, H, F)  (free reshape: real channels
        # first, imag channels second, exactly like torch.cat([re, im], dim=1))
        return out.reshape(b, 2, c, h // g, g, f).reshape(b, 2 * c, h, f)


def feature_conversion(x, *, channels: int, inverse: bool):
    """FeatureConversion.forward.  Tries single-buffered DFT matrices first and
    transparently falls back to default double-buffering if the installed JAX
    rejects pipeline_mode=pl.Buffered(1) during lowering."""
    try:
        return _feature_conversion_impl(x, channels=channels, inverse=inverse,
                                        single_buffer=True)
    except Exception:
        return _feature_conversion_impl(x, channels=channels, inverse=inverse,
                                        single_buffer=False)


# ----------------------------------------------------------------------------
# Demo / correctness check
# ----------------------------------------------------------------------------
if __name__ == "__main__":
    key = jax.random.PRNGKey(0)
    B, C, H, W = 2, 4, 16, 16
    x = jax.random.normal(key, (B, C, H, W), dtype=jnp.float32)

    # forward (rfft) pass: channels=C, inverse=False -> (B, 2C, H, W//2+1)
    y = feature_conversion(x, channels=C, inverse=False)
    y = jax.block_until_ready(y)
    assert y.shape == (B, 2 * C, H, W // 2 + 1), y.shape

    # reference: jnp.fft.rfft (matches torch.fft.rfft, norm='ortho')
    ref_c = jnp.fft.rfft(x.astype(jnp.float32), axis=3, norm="ortho")
    ref = jnp.concatenate([ref_c.real, ref_c.imag], axis=1).astype(x.dtype)
    np.testing.assert_allclose(np.asarray(y), np.asarray(ref),
                               rtol=1e-4, atol=1e-4)

    # inverse (irfft) pass on the forward output: channels=2C, inverse=True
    z = feature_conversion(y, channels=2 * C, inverse=True)
    z = jax.block_until_ready(z)
    assert z.shape == (B, C, H, W), z.shape

    ref_inv = jnp.fft.irfft(ref_c, axis=3, norm="ortho")
    np.testing.assert_allclose(np.asarray(z), np.asarray(ref_inv),
                               rtol=1e-4, atol=1e-4)
    # round-trip should recover the original signal
    np.testing.assert_allclose(np.asarray(z), np.asarray(x),
                               rtol=1e-3, atol=1e-3)

    # bf16 path (native bf16 MXU LHS + bf16 DFT matrices, f32 accumulation):
    # loose tolerance since the whole pipeline runs in bf16 precision.
    x_bf = x.astype(jnp.bfloat16)
    y_bf = feature_conversion(x_bf, channels=C, inverse=False)
    y_bf = jax.block_until_ready(y_bf)
    assert y_bf.shape == (B, 2 * C, H, W // 2 + 1), y_bf.shape
    assert y_bf.dtype == jnp.bfloat16, y_bf.dtype
    np.testing.assert_allclose(np.asarray(y_bf, dtype=np.float32),
                               np.asarray(ref, dtype=np.float32),
                               rtol=1e-1, atol=1e-1)

    print("KERNEL_OK")
</pallas_src>

<mosaic_0001>
module attributes {stable_mosaic.version = 11 : i64} {
  func.func @_rfft_kernel(%arg0: i32, %arg1: i32, %arg2: memref<1x4x256xf32, #tpu.memory_space<vmem>>, %arg3: memref<256x144xf32, #tpu.memory_space<vmem>>, %arg4: memref<256x144xf32, #tpu.memory_space<vmem>>, %arg5: memref<1x2x4x144xf32, #tpu.memory_space<vmem>>) attributes {dimension_semantics = [#tpu.dimension_semantics<parallel>, #tpu.dimension_semantics<parallel>], iteration_bounds = array<i64: 2, 1>, scalar_prefetch = 0 : i64, scratch_operands = 0 : i64, tpu.core_type = #tpu.core_type<tc>, window_params = [{transform_indices = @transform_0, window_bounds = array<i64: 1, 4, 256>}, {pipeline_mode = #tpu.pipeline_mode<synchronous>, transform_indices = @transform_1, window_bounds = array<i64: 256, 144>}, {pipeline_mode = #tpu.pipeline_mode<synchronous>, transform_indices = @transform_2, window_bounds = array<i64: 256, 144>}, {transform_indices = @transform_3, window_bounds = array<i64: 1, 2, 4, 144>}]} {
    %c0 = arith.constant 0 : index
    %c0_0 = arith.constant 0 : index
    %c0_1 = arith.constant 0 : index
    %0 = vector.load %arg2[%c0, %c0_0, %c0_1] : memref<1x4x256xf32, #tpu.memory_space<vmem>>, vector<1x4x256xf32>
    %1 = vector.shape_cast %0 : vector<1x4x256xf32> to vector<4x256xf32>
    %c0_2 = arith.constant 0 : index
    %c0_3 = arith.constant 0 : index
    %2 = vector.load %arg3[%c0_2, %c0_3] : memref<256x144xf32, #tpu.memory_space<vmem>>, vector<256x144xf32>
    %cst = arith.constant dense<0.000000e+00> : vector<4x144xf32>
    %3 = tpu.matmul %1, %2, %cst {dimension_numbers = #tpu.dot_dimension_numbers<[1], [0], [0], [1], [0, 0, 1, 1], [], []>} : vector<4x256xf32>, vector<256x144xf32>, vector<4x144xf32> -> vector<4x144xf32>
    %c0_4 = arith.constant 0 : index
    %c0_5 = arith.constant 0 : index
    %4 = vector.load %arg4[%c0_4, %c0_5] : memref<256x144xf32, #tpu.memory_space<vmem>>, vector<256x144xf32>
    %cst_6 = arith.constant dense<0.000000e+00> : vector<4x144xf32>
    %5 = tpu.matmul %1, %4, %cst_6 {dimension_numbers = #tpu.dot_dimension_numbers<[1], [0], [0], [1], [0, 0, 1, 1], [], []>} : vector<4x256xf32>, vector<256x144xf32>, vector<4x144xf32> -> vector<4x144xf32>
    %c0_7 = arith.constant 0 : index
    %c0_8 = arith.constant 0 : index
    %c0_9 = arith.constant 0 : index
    %c0_10 = arith.constant 0 : index
    %6 = vector.load %arg5[%c0_7, %c0_8, %c0_9, %c0_10] : memref<1x2x4x144xf32, #tpu.memory_space<vmem>>, vector<1x1x4x144xf32>
    %7 = vector.shape_cast %6 : vector<1x1x4x144xf32> to vector<4x144xf32>
    %8 = vector.shape_cast %3 : vector<4x144xf32> to vector<1x1x4x144xf32>
    tpu.vector_store %arg5[%c0_7, %c0_8, %c0_9, %c0_10], %8 {strides = array<i32>} : memref<1x2x4x144xf32, #tpu.memory_space<vmem>>, vector<1x1x4x144xf32>,
    %c0_11 = arith.constant 0 : index
    %c1 = arith.constant 1 : index
    %c0_12 = arith.constant 0 : index
    %c0_13 = arith.constant 0 : index
    %9 = vector.load %arg5[%c0_11, %c1, %c0_12, %c0_13] : memref<1x2x4x144xf32, #tpu.memory_space<vmem>>, vector<1x1x4x144xf32>
    %10 = vector.shape_cast %9 : vector<1x1x4x144xf32> to vector<4x144xf32>
    %11 = vector.shape_cast %5 : vector<4x144xf32> to vector<1x1x4x144xf32>
    tpu.vector_store %arg5[%c0_11, %c1, %c0_12, %c0_13], %11 {strides = array<i32>} : memref<1x2x4x144xf32, #tpu.memory_space<vmem>>, vector<1x1x4x144xf32>,
    return
  }
  func.func @transform_0(%arg0: i32, %arg1: i32) -> (i32, i32, i32) {
    %c0_i32 = arith.constant 0 : i32
    %c0_i32_0 = arith.constant 0 : i32
    return %arg0, %arg1, %c0_i32 : i32, i32, i32
  }
  func.func @transform_1(%arg0: i32, %arg1: i32) -> (i32, i32) {
    %c0_i32 = arith.constant 0 : i32
    %c0_i32_0 = arith.constant 0 : i32
    %c0_i32_1 = arith.constant 0 : i32
    return %c0_i32, %c0_i32_0 : i32, i32
  }
  func.func @transform_2(%arg0: i32, %arg1: i32) -> (i32, i32) {
    %c0_i32 = arith.constant 0 : i32
    %c0_i32_0 = arith.constant 0 : i32
    %c0_i32_1 = arith.constant 0 : i32
    return %c0_i32, %c0_i32_0 : i32, i32
  }
  func.func @transform_3(%arg0: i32, %arg1: i32) -> (i32, i32, i32, i32) {
    %c0_i32 = arith.constant 0 : i32
    %c0_i32_0 = arith.constant 0 : i32
    %c0_i32_1 = arith.constant 0 : i32
    return %arg0, %c0_i32, %arg1, %c0_i32_0 : i32, i32, i32, i32
  }
}

module attributes {stable_mosaic.version = 11 : i64} {
  func.func @_rfft_kernel(%arg0: i32, %arg1: i32, %arg2: memref<1x4x256xf32, #tpu.memory_space<vmem>>, %arg3: memref<256x144xf32, #tpu.memory_space<vmem>>, %arg4: memref<256x144xf32, #tpu.memory_space<vmem>>, %arg5: memref<1x2x4x144xf32, #tpu.memory_space<vmem>>) attributes {dimension_semantics = [#tpu.dimension_semantics<parallel>, #tpu.dimension_semantics<parallel>], iteration_bounds = array<i64: 2, 1>, scalar_prefetch = 0 : i64, scratch_operands = 0 : i64, tpu.core_type = #tpu.core_type<tc>, window_params = [{transform_indices = @transform_0, window_bounds = array<i64: 1, 4, 256>}, {pipeline_mode = #tpu.pipeline_mode<synchronous>, transform_indices = @transform_1, window_bounds = array<i64: 256, 144>}, {pipeline_mode = #tpu.pipeline_mode<synchronous>, transform_indices = @transform_2, window_bounds = array<i64: 256, 144>}, {transform_indices = @transform_3, window_bounds = array<i64: 1, 2, 4, 144>}]} {
    %c0 = arith.constant 0 : index
    %c0_0 = arith.constant 0 : index
    %c0_1 = arith.constant 0 : index
    %0 = vector.load %arg2[%c0, %c0_0, %c0_1] : memref<1x4x256xf32, #tpu.memory_space<vmem>>, vector<1x4x256xf32>
    %1 = vector.shape_cast %0 : vector<1x4x256xf32> to vector<4x256xf32>
    %c0_2 = arith.constant 0 : index
    %c0_3 = arith.constant 0 : index
    %2 = vector.load %arg3[%c0_2, %c0_3] : memref<256x144xf32, #tpu.memory_space<vmem>>, vector<256x144xf32>
    %cst = arith.constant dense<0.000000e+00> : vector<4x144xf32>
    %3 = tpu.matmul %1, %2, %cst {dimension_numbers = #tpu.dot_dimension_numbers<[1], [0], [0], [1], [0, 0, 1, 1], [], []>} : vector<4x256xf32>, vector<256x144xf32>, vector<4x144xf32> -> vector<4x144xf32>
    %c0_4 = arith.constant 0 : index
    %c0_5 = arith.constant 0 : index
    %4 = vector.load %arg4[%c0_4, %c0_5] : memref<256x144xf32, #tpu.memory_space<vmem>>, vector<256x144xf32>
    %cst_6 = arith.constant dense<0.000000e+00> : vector<4x144xf32>
    %5 = tpu.matmul %1, %4, %cst_6 {dimension_numbers = #tpu.dot_dimension_numbers<[1], [0], [0], [1], [0, 0, 1, 1], [], []>} : vector<4x256xf32>, vector<256x144xf32>, vector<4x144xf32> -> vector<4x144xf32>
    %c0_7 = arith.constant 0 : index
    %c0_8 = arith.constant 0 : index
    %c0_9 = arith.constant 0 : index
    %c0_10 = arith.constant 0 : index
    %6 = vector.load %arg5[%c0_7, %c0_8, %c0_9, %c0_10] : memref<1x2x4x144xf32, #tpu.memory_space<vmem>>, vector<1x1x4x144xf32>
    %7 = vector.shape_cast %6 : vector<1x1x4x144xf32> to vector<4x144xf32>
    %8 = vector.shape_cast %3 : vector<4x144xf32> to vector<1x1x4x144xf32>
    tpu.vector_store %arg5[%c0_7, %c0_8, %c0_9, %c0_10], %8 {strides = array<i32>} : memref<1x2x4x144xf32, #tpu.memory_space<vmem>>, vector<1x1x4x144xf32>,
    %c0_11 = arith.constant 0 : index
    %c1 = arith.constant 1 : index
    %c0_12 = arith.constant 0 : index
    %c0_13 = arith.constant 0 : index
    %9 = vector.load %arg5[%c0_11, %c1, %c0_12, %c0_13] : memref<1x2x4x144xf32, #tpu.memory_space<vmem>>, vector<1x1x4x144xf32>
    %10 = vector.shape_cast %9 : vector<1x1x4x144xf32> to vector<4x144xf32>
    %11 = vector.shape_cast %5 : vector<4x144xf32> to vector<1x1x4x144xf32>
    tpu.vector_store %arg5[%c0_11, %c1, %c0_12, %c0_13], %11 {strides = array<i32>} : memref<1x2x4x144xf32, #tpu.memory_space<vmem>>, vector<1x1x4x144xf32>,
    return
  }
  func.func @transform_0(%arg0: i32, %arg1: i32) -> (i32, i32, i32) {
    %c0_i32 = arith.constant 0 : i32
    %c0_i32_0 = arith.constant 0 : i32
    return %arg0, %arg1, %c0_i32 : i32, i32, i32
  }
  func.func @transform_1(%arg0: i32, %arg1: i32) -> (i32, i32) {
    %c0_i32 = arith.constant 0 : i32
    %c0_i32_0 = arith.constant 0 : i32
    %c0_i32_1 = arith.constant 0 : i32
    return %c0_i32, %c0_i32_0 : i32, i32
  }
  func.func @transform_2(%arg0: i32, %arg1: i32) -> (i32, i32) {
    %c0_i32 = arith.constant 0 : i32
    %c0_i32_0 = arith.constant 0 : i32
    %c0_i32_1 = arith.constant 0 : i32
    return %c0_i32, %c0_i32_0 : i32, i32
  }
  func.func @transform_3(%arg0: i32, %arg1: i32) -> (i32, i32, i32, i32) {
    %c0_i32 = arith.constant 0 : i32
    %c0_i32_0 = arith.constant 0 : i32
    %c0_i32_1 = arith.constant 0 : i32
    return %arg0, %c0_i32, %arg1, %c0_i32_0 : i32, i32, i32, i32
  }
}

</mosaic_0001>

<llo_original>
// kernel: _feature_conversion_impl.1
$region0: #{_feature_conversion_impl.1}
  #allocation0 [shape = 'u32[]', space=smem, size = 0x4, offset = 0x4, fixed_abs, tag = 'smem constant byte address 0x4 - core index']
  #allocation1 [shape = 'u32[72,128]{1,0:T(1,128)}', space=vmem, size = 0x9000, scoped, tag = 'internal scratch']
  %s0 = inlined_call_operand.vmem [shape: f32[2,4,256], index: 0, kind: input, shape index: {}]
  %s1 = inlined_call_operand.hbm [shape: f32[256,144], index: 1, kind: input, shape index: {}]
  %s2 = inlined_call_operand.hbm [shape: f32[256,144], index: 2, kind: input, shape index: {}]
  %s3 = inlined_call_operand.vmem [shape: f32[2,2,4,144], index: 3, kind: output, shape index: {}]
  %s4 = sld [smem:[#allocation0]]
  $region53: #{_feature_conversion_impl.1} parent=0
    _
  %s6 = ssub.s32 1, %s4
  %s7 = scalar_select 0, %s6, %s4
  $region1: #{_feature_conversion_impl.1} parent=0
    #allocation2 [shape = 'u8[262144]{0}', space=vmem, size = 0x40000, scoped, tag = 'input window, operand 1, single buffered']
    #allocation3 [shape = 's32[2]{0}', space=sflag, size = 0x8, scoped, tag = 'scoped memory for _feature_conversion_impl.1']
    #allocation4 [shape = 'u8[262144]{0}', space=vmem, size = 0x40000, scoped, tag = 'input window, operand 2, single buffered']
    #allocation5 [shape = 's32[1]{0}', space=sflag, size = 0x4, scoped, tag = 'scoped memory for _feature_conversion_impl.1']
    %8 = vsyncpa [#allocation3], 0
    %9 = vsyncpa [#allocation5], 0
    loop: start=0, step=1, limit=4
    $region2: #{_feature_conversion_impl.1} parent=1 // loop_pre_header
      _
    $region3: #{_feature_conversion_impl.1} parent=1 // loop_header
      %s11 = sphi 0, %s15
      %p12 = scmp.ge.s32.totalorder %s11, 4
      %s18 = sphi 0, %s30
      %s19 = sphi 0, %s26
      %s20 = sphi 0, %s18
      %s21 = sphi 0, %s19
      %s22 = sphi 0, %s20
      %s23 = sphi 0, %s21
      %s35 = sphi 0, %s37
      %s38 = sphi 0, %s35
      %s39 = sphi 0, %s38
      %s55 = sphi 0, %s39
      %s59 = sphi 0, %s59
      %s61 = sphi 0, %s59
      %s62 = sphi 0, %s61
      %s76 = sphi 0, %s62
      %s80 = sphi 0, %s80
      %s82 = sphi 0, %s80
      %s83 = sphi 0, %s82
      %s97 = sphi 0, %s83
      %s105 = sphi 0, %s107
      %s108 = sphi 0, %s105
      %s109 = sphi 0, %s108
      %s125 = sphi 0, %s109
    $region4: #{_feature_conversion_impl.1} parent=1 // loop_header_branch
      %14 = sbr.rel (%p12) target = $region8
    $region5: #{_feature_conversion_impl.1} parent=1 // loop_body
      %s16 = ssub.s32 %s11, 1
      %s17 = ssub.s32 %s11, 2
      %s24 = sadd.s32 1, %s19
      %p25 = scmp.ge.s32.totalorder %s24, 1
      %s26 = scalar_select %p25, 0, %s24
      %s27 = sadd.s32 1, %s18
      %s28 = scalar_select %p25, %s27, %s18
      %p29 = scmp.ge.s32.totalorder %s28, 2
      %s30 = scalar_select %p29, 0, %s28
      %s31 = ssub.s32 %s18, %s30
      %s32 = ssub.s32 %s19, %s26
      %s33 = sor.u32 %s31, %s32
      %p34 = scmp.eq.s32.totalorder %s33, 0
      %s36 = sadd.s32 %s35, 1
      %s37 = scalar_select %p34, %s35, %s36
      %p40 = pneg %p34
      %p41 = scmp.eq.s32.totalorder %s11, 1
      %p42 = por %p40, %p41
      %p43 = scmp.ne.s32.totalorder %s35, %s38
      %p44 = scmp.eq.s32.totalorder %s11, 0
      %p45 = por %p43, %p44
      %p46 = scmp.ne.s32.totalorder %s35, %s38
      %p47 = scmp.eq.s32.totalorder %s16, 1
      %p48 = por %p46, %p47
      %p49 = scmp.ne.s32.totalorder %s38, %s39
      %p50 = scmp.eq.s32.totalorder %s16, 0
      %p51 = por %p49, %p50
      %p52 = scmp.ne.s32.totalorder %s38, %s39
      %p53 = scmp.eq.s32.totalorder %s17, 1
      %p54 = por %p52, %p53
      %p56 = scmp.ne.s32.totalorder %s39, %s55
      %p57 = scmp.eq.s32.totalorder %s17, 0
      %p58 = por %p56, %p57
      %s60 = sadd.s32 %s59, 1
      %p63 = scmp.eq.s32.totalorder %s11, 1
      %p64 = scmp.ne.s32.totalorder %s59, %s61
      %p65 = scmp.eq.s32.totalorder %s11, 0
      %p66 = por %p64, %p65
      %p67 = scmp.ne.s32.totalorder %s59, %s61
      %p68 = scmp.eq.s32.totalorder %s16, 1
      %p69 = por %p67, %p68
      %p70 = scmp.ne.s32.totalorder %s61, %s62
      %p71 = scmp.eq.s32.totalorder %s16, 0
      %p72 = por %p70, %p71
      %p73 = scmp.ne.s32.totalorder %s61, %s62
      %p74 = scmp.eq.s32.totalorder %s17, 1
      %p75 = por %p73, %p74
      %p77 = scmp.ne.s32.totalorder %s62, %s76
      %p78 = scmp.eq.s32.totalorder %s17, 0
      %p79 = por %p77, %p78
      %s81 = sadd.s32 %s80, 1
      %p84 = scmp.eq.s32.totalorder %s11, 1
      %p85 = scmp.ne.s32.totalorder %s80, %s82
      %p86 = scmp.eq.s32.totalorder %s11, 0
      %p87 = por %p85, %p86
      %p88 = scmp.ne.s32.totalorder %s80, %s82
      %p89 = scmp.eq.s32.totalorder %s16, 1
      %p90 = por %p88, %p89
      %p91 = scmp.ne.s32.totalorder %s82, %s83
      %p92 = scmp.eq.s32.totalorder %s16, 0
      %p93 = por %p91, %p92
      %p94 = scmp.ne.s32.totalorder %s82, %s83
      %p95 = scmp.eq.s32.totalorder %s17, 1
      %p96 = por %p94, %p95
      %p98 = scmp.ne.s32.totalorder %s83, %s97
      %p99 = scmp.eq.s32.totalorder %s17, 0
      %p100 = por %p98, %p99
      %s101 = ssub.s32 %s18, %s30
      %s102 = ssub.s32 %s19, %s26
      %s103 = sor.u32 %s101, %s102
      %p104 = scmp.eq.s32.totalorder %s103, 0
      %s106 = sadd.s32 %s105, 1
      %s107 = scalar_select %p104, %s105, %s106
      %p110 = pneg %p104
      %p111 = scmp.eq.s32.totalorder %s11, 1
      %p112 = por %p110, %p111
      %p113 = scmp.ne.s32.totalorder %s105, %s108
      %p114 = scmp.eq.s32.totalorder %s11, 0
      %p115 = por %p113, %p114
      %p116 = scmp.ne.s32.totalorder %s105, %s108
      %p117 = scmp.eq.s32.totalorder %s16, 1
      %p118 = por %p116, %p117
      %p119 = scmp.ne.s32.totalorder %s108, %s109
      %p120 = scmp.eq.s32.totalorder %s16, 0
      %p121 = por %p119, %p120
      %p122 = scmp.ne.s32.totalorder %s108, %s109
      %p123 = scmp.eq.s32.totalorder %s17, 1
      %p124 = por %p122, %p123
      %p126 = scmp.ne.s32.totalorder %s109, %s125
      %p127 = scmp.eq.s32.totalorder %s17, 0
      %p128 = por %p126, %p127
      %p129 = scmp.le.s32.totalorder 1, %s11
      %p130 = scmp.lt.s32.totalorder %s11, 3
      %p131 = pnand %p129, %p130
      %p132 = pneg %p131
      // Predicated region
      $region9: #{_feature_conversion_impl.1} parent=5 // pred_check
        _
      $region10: #{_feature_conversion_impl.1} parent=5 // pred_check_branch
        %134 = sbr.rel (%p131) target = $region12
      $region11: #{_feature_conversion_impl.1} parent=5 // pred_region
        %s135 = ssub.s32 %s11, 1
        // Predicated region
        $region13: #{_feature_conversion_impl.1} parent=11 // pred_check
          %p136 = pneg %p72
        $region14: #{_feature_conversion_impl.1} parent=11 // pred_check_branch
          %138 = sbr.rel (%p136) target = $region16
        $region15: #{_feature_conversion_impl.1} parent=11 // pred_region
          %140 = vsyncadd [#allocation3], 0
          %s141 = sshll.u32 %s1, 4
          %s142 = int_to_ptr.hbm [resolvable:$true] %s141
          %s143 = sshll.u32 [#allocation2], 4
          %s144 = int_to_ptr.vmem [resolvable:$true] %s143
          %149 = dma.hbm_to_vmem [thread:$0]  %s142, 8192, %s144, [#allocation3], 256, 256, 16
        $region16: #{_feature_conversion_impl.1} parent=11 // pred_fallthru
          _
        // Predicated region
        $region17: #{_feature_conversion_impl.1} parent=11 // pred_check
          %p150 = pneg %p93
        $region18: #{_feature_conversion_impl.1} parent=11 // pred_check_branch
          %152 = sbr.rel (%p150) target = $region20
        $region19: #{_feature_conversion_impl.1} parent=11 // pred_region
          %154 = vsyncadd [#allocation5], 0
          %s155 = sshll.u32 %s2, 4
          %s156 = int_to_ptr.hbm [resolvable:$true] %s155
          %s157 = sshll.u32 [#allocation4], 4
          %s158 = int_to_ptr.vmem [resolvable:$true] %s157
          %163 = dma.hbm_to_vmem [thread:$0]  %s156, 8192, %s158, [#allocation5], 256, 256, 16
        $region20: #{_feature_conversion_impl.1} parent=11 // pred_fallthru
          _
      $region12: #{_feature_conversion_impl.1} parent=5 // pred_fallthru
        _
      %p164 = scmp.lt.s32.totalorder %s11, 2
      // Predicated region
      $region21: #{_feature_conversion_impl.1} parent=5 // pred_check
        %p165 = pneg %p164
      $region22: #{_feature_conversion_impl.1} parent=5 // pred_check_branch
        %167 = sbr.rel (%p165) target = $region24
      $region23: #{_feature_conversion_impl.1} parent=5 // pred_region
        // Predicated region
        $region25: #{_feature_conversion_impl.1} parent=23 // pred_check
          %p168 = pneg %p45
        $region26: #{_feature_conversion_impl.1} parent=23 // pred_check_branch
          %170 = sbr.rel (%p168) target = $region28
        $region27: #{_feature_conversion_impl.1} parent=23 // pred_region
          %p171 = scmp.lt.s32.totalorder %s18, 1
          %s172 = scalar_select %p171, %s18, 1
          %p173 = scmp.lt.s32.totalorder %s19, 0
          %s174 = scalar_select %p173, %s19, 0
          %s175 = smul.addr %s174, 2
          %s176 = smul.addr %s172, 2
          %s177 = sadd.s32 %s175, %s176
          %s178 = smul.addr %s177, 4
          %s179 = scalar_lea.vmem %s0, %s178
        $region28: #{_feature_conversion_impl.1} parent=23 // pred_fallthru
          _
      $region24: #{_feature_conversion_impl.1} parent=5 // pred_fallthru
        _
      %p180 = scmp.le.s32.totalorder 1, %s11
      %p181 = scmp.lt.s32.totalorder %s11, 3
      %p182 = pnand %p180, %p181
      %p183 = pneg %p182
      // Predicated region
      $region29: #{_feature_conversion_impl.1} parent=5 // pred_check
        _
      $region30: #{_feature_conversion_impl.1} parent=5 // pred_check_branch
        %185 = sbr.rel (%p182) target = $region32
      $region31: #{_feature_conversion_impl.1} parent=5 // pred_region
        %s186 = ssub.s32 %s11, 1
        // Predicated region
        $region33: #{_feature_conversion_impl.1} parent=31 // pred_check
          %p187 = pneg %p72
        $region34: #{_feature_conversion_impl.1} parent=31 // pred_check_branch
          %189 = sbr.rel (%p187) target = $region36
        $region35: #{_feature_conversion_impl.1} parent=31 // pred_region
          %191 = dma.done [#allocation3], 8192
        $region36: #{_feature_conversion_impl.1} parent=31 // pred_fallthru
          _
        // Predicated region
        $region37: #{_feature_conversion_impl.1} parent=31 // pred_check
          %p192 = pneg %p93
        $region38: #{_feature_conversion_impl.1} parent=31 // pred_check_branch
          %194 = sbr.rel (%p192) target = $region40
        $region39: #{_feature_conversion_impl.1} parent=31 // pred_region
          %196 = dma.done [#allocation5], 8192
        $region40: #{_feature_conversion_impl.1} parent=31 // pred_fallthru
          _
        %p197 = scmp.lt.s32.totalorder %s20, 1
        %s198 = scalar_select %p197, %s20, 1
        %p199 = scmp.lt.s32.totalorder %s21, 0
        %s200 = scalar_select %p199, %s21, 0
        %s201 = smul.addr %s200, 2
        %s202 = smul.addr %s198, 2
        %s203 = sadd.s32 %s201, %s202
        %s204 = smul.addr %s203, 4
        %s205 = scalar_lea.vmem %s0, %s204
        %p206 = pneg %p51
        %p207 = pneg %p48
        %p208 = pneg %p72
        %p209 = pneg %p69
        %p210 = pneg %p93
        %p211 = pneg %p90
        %p212 = pneg %p121
        %p213 = pneg %p118
        %p214 = scmp.lt.s32.totalorder %s20, 1
        %s215 = scalar_select %p214, %s20, 1
        %p216 = scmp.lt.s32.totalorder %s21, 0
        %s217 = scalar_select %p216, %s21, 0
        %s218 = smul.addr %s217, 2
        %s219 = smul.addr %s215, 4
        %s220 = sadd.s32 %s218, %s219
        %s221 = smul.addr %s220, 4
        %s222 = scalar_lea.vmem %s3, %s221
        %p223 = scmp.lt.s32.totalorder %s20, 1
        %s224 = scalar_select %p223, %s20, 1
        %p225 = scmp.lt.s32.totalorder %s21, 0
        %s226 = scalar_select %p225, %s21, 0
        %s227 = smul.addr %s226, 2
        %s228 = smul.addr %s224, 2
        %s229 = sadd.s32 %s227, %s228
        %s230 = smul.addr %s229, 4
        %s231 = scalar_lea.vmem %s0, %s230
        %p232 = scmp.lt.s32.totalorder %s20, 1
        %s233 = scalar_select %p232, %s20, 1
        %p234 = scmp.lt.s32.totalorder %s21, 0
        %s235 = scalar_select %p234, %s21, 0
        %s236 = smul.addr %s235, 2
        %s237 = smul.addr %s233, 4
        %s238 = sadd.s32 %s236, %s237
        %s239 = smul.addr %s238, 4
        %s240 = scalar_lea.vmem %s3, %s239
        %v241 = vld [vmem:[%s231] sm:$0xff]
        %v242 = vld [vmem:[#allocation2] sm:$0xff]
        %v243 = vld [vmem:[#allocation2 + $0x8] sm:$0xff]
        %v244 = vld [vmem:[#allocation2 + $0x10] sm:$0xff]
        %v245 = vld [vmem:[#allocation2 + $0x18] sm:$0xff]
        %v246 = vld [vmem:[#allocation2 + $0x20] sm:$0xff]
        %v247 = vld [vmem:[#allocation2 + $0x28] sm:$0xff]
        %v248 = vld [vmem:[#allocation2 + $0x30] sm:$0xff]
        %v249 = vld [vmem:[#allocation2 + $0x38] sm:$0xff]
        %v250 = vld [vmem:[#allocation2 + $0x40] sm:$0xff]
        %v251 = vld [vmem:[#allocation2 + $0x48] sm:$0xff]
        %v252 = vld [vmem:[#allocation2 + $0x50] sm:$0xff]
        %v253 = vld [vmem:[#allocation2 + $0x58] sm:$0xff]
        %v254 = vld [vmem:[#allocation2 + $0x60] sm:$0xff]
        %v255 = vld [vmem:[#allocation2 + $0x68] sm:$0xff]
        %v256 = vld [vmem:[#allocation2 + $0x70] sm:$0xff]
        %v257 = vld [vmem:[#allocation2 + $0x78] sm:$0xff]
        %v258 = vld [vmem:[#allocation2 + $0x80] sm:$0xff]
        %v259 = vld [vmem:[#allocation2 + $0x88] sm:$0xff]
        %v260 = vld [vmem:[#allocation2 + $0x90] sm:$0xff]
        %v261 = vld [vmem:[#allocation2 + $0x98] sm:$0xff]
        %v262 = vld [vmem:[#allocation2 + $0xa0] sm:$0xff]
        %v263 = vld [vmem:[#allocation2 + $0xa8] sm:$0xff]
        %v264 = vld [vmem:[#allocation2 + $0xb0] sm:$0xff]
        %v265 = vld [vmem:[#allocation2 + $0xb8] sm:$0xff]
        %v266 = vld [vmem:[#allocation2 + $0xc0] sm:$0xff]
        %v267 = vld [vmem:[#allocation2 + $0xc8] sm:$0xff]
        %v268 = vld [vmem:[#allocation2 + $0xd0] sm:$0xff]
        %v269 = vld [vmem:[#allocation2 + $0xd8] sm:$0xff]
        %v270 = vld [vmem:[#allocation2 + $0xe0] sm:$0xff]
        %v271 = vld [vmem:[#allocation2 + $0xe8] sm:$0xff]
        %v272 = vld [vmem:[#allocation2 + $0xf0] sm:$0xff]
        %v273 = vld [vmem:[#allocation2 + $0xf8] sm:$0xff]
        %v274 = vld [vmem:[#allocation2 + $0x100] sm:$0xff]
        %v275 = vld [vmem:[#allocation2 + $0x108] sm:$0xff]
        %v276 = vld [vmem:[#allocation2 + $0x110] sm:$0xff]
        %v277 = vld [vmem:[#allocation2 + $0x118] sm:$0xff]
        %v278 = vld [vmem:[#allocation2 + $0x120] sm:$0xff]
        %v279 = vld [vmem:[#allocation2 + $0x128] sm:$0xff]
        %v280 = vld [vmem:[#allocation2 + $0x130] sm:$0xff]
        %v281 = vld [vmem:[#allocation2 + $0x138] sm:$0xff]
        %v282 = vld [vmem:[#allocation2 + $0x140] sm:$0xff]
        %v283 = vld [vmem:[#allocation2 + $0x148] sm:$0xff]
        %v284 = vld [vmem:[#allocation2 + $0x150] sm:$0xff]
        %v285 = vld [vmem:[#allocation2 + $0x158] sm:$0xff]
        %v286 = vld [vmem:[#allocation2 + $0x160] sm:$0xff]
        %v287 = vld [vmem:[#allocation2 + $0x168] sm:$0xff]
        %v288 = vld [vmem:[#allocation2 + $0x170] sm:$0xff]
        %v289 = vld [vmem:[#allocation2 + $0x178] sm:$0xff]
        %v290 = vld [vmem:[#allocation2 + $0x180] sm:$0xff]
        %v291 = vld [vmem:[#allocation2 + $0x188] sm:$0xff]
        %v292 = vld [vmem:[#allocation2 + $0x190] sm:$0xff]
        %v293 = vld [vmem:[#allocation2 + $0x198] sm:$0xff]
        %v294 = vld [vmem:[#allocation2 + $0x1a0] sm:$0xff]
        %v295 = vld [vmem:[#allocation2 + $0x1a8] sm:$0xff]
        %v296 = vld [vmem:[#allocation2 + $0x1b0] sm:$0xff]
        %v297 = vld [vmem:[#allocation2 + $0x1b8] sm:$0xff]
        %v298 = vld [vmem:[#allocation2 + $0x1c0] sm:$0xff]
        %v299 = vld [vmem:[#allocation2 + $0x1c8] sm:$0xff]
        %v300 = vld [vmem:[#allocation2 + $0x1d0] sm:$0xff]
        %v301 = vld [vmem:[#allocation2 + $0x1d8] sm:$0xff]
        %v302 = vld [vmem:[#allocation2 + $0x1e0] sm:$0xff]
        %v303 = vld [vmem:[#allocation2 + $0x1e8] sm:$0xff]
        %v304 = vld [vmem:[#allocation2 + $0x1f0] sm:$0xff]
        %v305 = vld [vmem:[#allocation2 + $0x1f8] sm:$0xff]
        %307 = vst [vmem:[#allocation1] ss:$2 sm:$0xff] %v241
        %v308 = vld.sshfl [vmem:[#allocation1] sm:$0xff pattern:$0x75316420]
        %v309 = vld.sshfl [vmem:[#allocation1 + $0x8] sm:$0xff pattern:$0x75316420]
        %312 = vmatpush.msra.mxu0 %v272
        %313 = vmatpush.msra.mxu0 %v270
        %314 = vmatpush.msra.mxu0 %v268
        %315 = vmatpush.msra.mxu0 %v266
        %316 = vmatpush.msra.mxu0 %v264
        %317 = vmatpush.msra.mxu0 %v262
        %318 = vmatpush.msra.mxu0 %v260
        %319 = vmatpush.msra.mxu0 %v258
        %320 = vmatpush.msra.mxu0 %v256
        %321 = vmatpush.msra.mxu0 %v254
        %322 = vmatpush.msra.mxu0 %v252
        %323 = vmatpush.msra.mxu0 %v250
        %324 = vmatpush.msra.mxu0 %v248
        %325 = vmatpush.msra.mxu0 %v246
        %326 = vmatpush.msra.mxu0 %v244
        %327 = vmatpush.msra.mxu0 %v242
        %328 = vmatmul.f32.gmra.mxu0 %v308
        %v329 = vpop.f32.mrf.mxu0
        %v330 = vadd.f32 0.0, %v329
        %331 = vdwg.mxu0
        %332 = vmatpush.msra.mxu0 %v304
        %333 = vmatpush.msra.mxu0 %v302
        %334 = vmatpush.msra.mxu0 %v300
        %335 = vmatpush.msra.mxu0 %v298
        %336 = vmatpush.msra.mxu0 %v296
        %337 = vmatpush.msra.mxu0 %v294
        %338 = vmatpush.msra.mxu0 %v292
        %339 = vmatpush.msra.mxu0 %v290
        %340 = vmatpush.msra.mxu0 %v288
        %341 = vmatpush.msra.mxu0 %v286
        %342 = vmatpush.msra.mxu0 %v284
        %343 = vmatpush.msra.mxu0 %v282
        %344 = vmatpush.msra.mxu0 %v280
        %345 = vmatpush.msra.mxu0 %v278
        %346 = vmatpush.msra.mxu0 %v276
        %347 = vmatpush.msra.mxu0 %v274
        %348 = vmatmul.f32.gmra.mxu0 %v309
        %v349 = vpop.f32.mrf.mxu0
        %v350 = vadd.f32 %v330, %v349
        %351 = vdwg.mxu0
        %352 = vmatpush.msra.mxu0 %v273
        %353 = vmatpush.msra.mxu0 %v271
        %354 = vmatpush.msra.mxu0 %v269
        %355 = vmatpush.msra.mxu0 %v267
        %356 = vmatpush.msra.mxu0 %v265
        %357 = vmatpush.msra.mxu0 %v263
        %358 = vmatpush.msra.mxu0 %v261
        %359 = vmatpush.msra.mxu0 %v259
        %360 = vmatpush.msra.mxu0 %v257
        %361 = vmatpush.msra.mxu0 %v255
        %362 = vmatpush.msra.mxu0 %v253
        %363 = vmatpush.msra.mxu0 %v251
        %364 = vmatpush.msra.mxu0 %v249
        %365 = vmatpush.msra.mxu0 %v247
        %366 = vmatpush.msra.mxu0 %v245
        %367 = vmatpush.msra.mxu0 %v243
        %368 = vmatmul.f32.gmra.mxu0 %v308
        %v369 = vpop.f32.mrf.mxu0
        %v370 = vadd.f32 0.0, %v369
        %371 = vdwg.mxu0
        %372 = vmatpush.msra.mxu0 %v305
        %373 = vmatpush.msra.mxu0 %v303
        %374 = vmatpush.msra.mxu0 %v301
        %375 = vmatpush.msra.mxu0 %v299
        %376 = vmatpush.msra.mxu0 %v297
        %377 = vmatpush.msra.mxu0 %v295
        %378 = vmatpush.msra.mxu0 %v293
        %379 = vmatpush.msra.mxu0 %v291
        %380 = vmatpush.msra.mxu0 %v289
        %381 = vmatpush.msra.mxu0 %v287
        %382 = vmatpush.msra.mxu0 %v285
        %383 = vmatpush.msra.mxu0 %v283
        %384 = vmatpush.msra.mxu0 %v281
        %385 = vmatpush.msra.mxu0 %v279
        %386 = vmatpush.msra.mxu0 %v277
        %387 = vmatpush.msra.mxu0 %v275
        %388 = vmatmul.f32.gmra.mxu0 %v309
        %v389 = vpop.f32.mrf.mxu0
        %v390 = vadd.f32 %v370, %v389
        %391 = vdwg.mxu0
        %v392 = vld [vmem:[#allocation4] sm:$0xff]
        %v393 = vld [vmem:[#allocation4 + $0x8] sm:$0xff]
        %v394 = vld [vmem:[#allocation4 + $0x10] sm:$0xff]
        %v395 = vld [vmem:[#allocation4 + $0x18] sm:$0xff]
        %v396 = vld [vmem:[#allocation4 + $0x20] sm:$0xff]
        %v397 = vld [vmem:[#allocation4 + $0x28] sm:$0xff]
        %v398 = vld [vmem:[#allocation4 + $0x30] sm:$0xff]
        %v399 = vld [vmem:[#allocation4 + $0x38] sm:$0xff]
        %v400 = vld [vmem:[#allocation4 + $0x40] sm:$0xff]
        %v401 = vld [vmem:[#allocation4 + $0x48] sm:$0xff]
        %v402 = vld [vmem:[#allocation4 + $0x50] sm:$0xff]
        %v403 = vld [vmem:[#allocation4 + $0x58] sm:$0xff]
        %v404 = vld [vmem:[#allocation4 + $0x60] sm:$0xff]
        %v405 = vld [vmem:[#allocation4 + $0x68] sm:$0xff]
        %v406 = vld [vmem:[#allocation4 + $0x70] sm:$0xff]
        %v407 = vld [vmem:[#allocation4 + $0x78] sm:$0xff]
        %v408 = vld [vmem:[#allocation4 + $0x80] sm:$0xff]
        %v409 = vld [vmem:[#allocation4 + $0x88] sm:$0xff]
        %v410 = vld [vmem:[#allocation4 + $0x90] sm:$0xff]
        %v411 = vld [vmem:[#allocation4 + $0x98] sm:$0xff]
        %v412 = vld [vmem:[#allocation4 + $0xa0] sm:$0xff]
        %v413 = vld [vmem:[#allocation4 + $0xa8] sm:$0xff]
        %v414 = vld [vmem:[#allocation4 + $0xb0] sm:$0xff]
        %v415 = vld [vmem:[#allocation4 + $0xb8] sm:$0xff]
        %v416 = vld [vmem:[#allocation4 + $0xc0] sm:$0xff]
        %v417 = vld [vmem:[#allocation4 + $0xc8] sm:$0xff]
        %v418 = vld [vmem:[#allocation4 + $0xd0] sm:$0xff]
        %v419 = vld [vmem:[#allocation4 + $0xd8] sm:$0xff]
        %v420 = vld [vmem:[#allocation4 + $0xe0] sm:$0xff]
        %v421 = vld [vmem:[#allocation4 + $0xe8] sm:$0xff]
        %v422 = vld [vmem:[#allocation4 + $0xf0] sm:$0xff]
        %v423 = vld [vmem:[#allocation4 + $0xf8] sm:$0xff]
        %v424 = vld [vmem:[#allocation4 + $0x100] sm:$0xff]
        %v425 = vld [vmem:[#allocation4 + $0x108] sm:$0xff]
        %v426 = vld [vmem:[#allocation4 + $0x110] sm:$0xff]
        %v427 = vld [vmem:[#allocation4 + $0x118] sm:$0xff]
        %v428 = vld [vmem:[#allocation4 + $0x120] sm:$0xff]
        %v429 = vld [vmem:[#allocation4 + $0x128] sm:$0xff]
        %v430 = vld [vmem:[#allocation4 + $0x130] sm:$0xff]
        %v431 = vld [vmem:[#allocation4 + $0x138] sm:$0xff]
        %v432 = vld [vmem:[#allocation4 + $0x140] sm:$0xff]
        %v433 = vld [vmem:[#allocation4 + $0x148] sm:$0xff]
        %v434 = vld [vmem:[#allocation4 + $0x150] sm:$0xff]
        %v435 = vld [vmem:[#allocation4 + $0x158] sm:$0xff]
        %v436 = vld [vmem:[#allocation4 + $0x160] sm:$0xff]
        %v437 = vld [vmem:[#allocation4 + $0x168] sm:$0xff]
        %v438 = vld [vmem:[#allocation4 + $0x170] sm:$0xff]
        %v439 = vld [vmem:[#allocation4 + $0x178] sm:$0xff]
        %v440 = vld [vmem:[#allocation4 + $0x180] sm:$0xff]
        %v441 = vld [vmem:[#allocation4 + $0x188] sm:$0xff]
        %v442 = vld [vmem:[#allocation4 + $0x190] sm:$0xff]
        %v443 = vld [vmem:[#allocation4 + $0x198] sm:$0xff]
        %v444 = vld [vmem:[#allocation4 + $0x1a0] sm:$0xff]
        %v445 = vld [vmem:[#allocation4 + $0x1a8] sm:$0xff]
        %v446 = vld [vmem:[#allocation4 + $0x1b0] sm:$0xff]
        %v447 = vld [vmem:[#allocation4 + $0x1b8] sm:$0xff]
        %v448 = vld [vmem:[#allocation4 + $0x1c0] sm:$0xff]
        %v449 = vld [vmem:[#allocation4 + $0x1c8] sm:$0xff]
        %v450 = vld [vmem:[#allocation4 + $0x1d0] sm:$0xff]
        %v451 = vld [vmem:[#allocation4 + $0x1d8] sm:$0xff]
        %v452 = vld [vmem:[#allocation4 + $0x1e0] sm:$0xff]
        %v453 = vld [vmem:[#allocation4 + $0x1e8] sm:$0xff]
        %v454 = vld [vmem:[#allocation4 + $0x1f0] sm:$0xff]
        %v455 = vld [vmem:[#allocation4 + $0x1f8] sm:$0xff]
        %456 = vst [vmem:[#allocation1] ss:$2 sm:$0xff] %v241
        %v457 = vld.sshfl [vmem:[#allocation1] sm:$0xff pattern:$0x75316420]
        %v458 = vld.sshfl [vmem:[#allocation1 + $0x8] sm:$0xff pattern:$0x75316420]
        %461 = vmatpush.msra.mxu0 %v422
        %462 = vmatpush.msra.mxu0 %v420
        %463 = vmatpush.msra.mxu0 %v418
        %464 = vmatpush.msra.mxu0 %v416
        %465 = vmatpush.msra.mxu0 %v414
        %466 = vmatpush.msra.mxu0 %v412
        %467 = vmatpush.msra.mxu0 %v410
        %468 = vmatpush.msra.mxu0 %v408
        %469 = vmatpush.msra.mxu0 %v406
        %470 = vmatpush.msra.mxu0 %v404
        %471 = vmatpush.msra.mxu0 %v402
        %472 = vmatpush.msra.mxu0 %v400
        %473 = vmatpush.msra.mxu0 %v398
        %474 = vmatpush.msra.mxu0 %v396
        %475 = vmatpush.msra.mxu0 %v394
        %476 = vmatpush.msra.mxu0 %v392
        %477 = vmatmul.f32.gmra.mxu0 %v457
        %v478 = vpop.f32.mrf.mxu0
        %v479 = vadd.f32 0.0, %v478
        %480 = vdwg.mxu0
        %481 = vmatpush.msra.mxu0 %v454
        %482 = vmatpush.msra.mxu0 %v452
        %483 = vmatpush.msra.mxu0 %v450
        %484 = vmatpush.msra.mxu0 %v448
        %485 = vmatpush.msra.mxu0 %v446
        %486 = vmatpush.msra.mxu0 %v444
        %487 = vmatpush.msra.mxu0 %v442
        %488 = vmatpush.msra.mxu0 %v440
        %489 = vmatpush.msra.mxu0 %v438
        %490 = vmatpush.msra.mxu0 %v436
        %491 = vmatpush.msra.mxu0 %v434
        %492 = vmatpush.msra.mxu0 %v432
        %493 = vmatpush.msra.mxu0 %v430
        %494 = vmatpush.msra.mxu0 %v428
        %495 = vmatpush.msra.mxu0 %v426
        %496 = vmatpush.msra.mxu0 %v424
        %497 = vmatmul.f32.gmra.mxu0 %v458
        %v498 = vpop.f32.mrf.mxu0
        %v499 = vadd.f32 %v479, %v498
        %500 = vdwg.mxu0
        %501 = vmatpush.msra.mxu0 %v423
        %502 = vmatpush.msra.mxu0 %v421
        %503 = vmatpush.msra.mxu0 %v419
        %504 = vmatpush.msra.mxu0 %v417
        %505 = vmatpush.msra.mxu0 %v415
        %506 = vmatpush.msra.mxu0 %v413
        %507 = vmatpush.msra.mxu0 %v411
        %508 = vmatpush.msra.mxu0 %v409
        %509 = vmatpush.msra.mxu0 %v407
        %510 = vmatpush.msra.mxu0 %v405
        %511 = vmatpush.msra.mxu0 %v403
        %512 = vmatpush.msra.mxu0 %v401
        %513 = vmatpush.msra.mxu0 %v399
        %514 = vmatpush.msra.mxu0 %v397
        %515 = vmatpush.msra.mxu0 %v395
        %516 = vmatpush.msra.mxu0 %v393
        %517 = vmatmul.f32.gmra.mxu0 %v457
        %v518 = vpop.f32.mrf.mxu0
        %v519 = vadd.f32 0.0, %v518
        %520 = vdwg.mxu0
        %521 = vmatpush.msra.mxu0 %v455
        %522 = vmatpush.msra.mxu0 %v453
        %523 = vmatpush.msra.mxu0 %v451
        %524 = vmatpush.msra.mxu0 %v449
        %525 = vmatpush.msra.mxu0 %v447
        %526 = vmatpush.msra.mxu0 %v445
        %527 = vmatpush.msra.mxu0 %v443
        %528 = vmatpush.msra.mxu0 %v441
        %529 = vmatpush.msra.mxu0 %v439
        %530 = vmatpush.msra.mxu0 %v437
        %531 = vmatpush.msra.mxu0 %v435
        %532 = vmatpush.msra.mxu0 %v433
        %533 = vmatpush.msra.mxu0 %v431
        %534 = vmatpush.msra.mxu0 %v429
        %535 = vmatpush.msra.mxu0 %v427
        %536 = vmatpush.msra.mxu0 %v425
        %537 = vmatmul.f32.gmra.mxu0 %v458
        %v538 = vpop.f32.mrf.mxu0
        %v539 = vadd.f32 %v519, %v538
        %540 = vdwg.mxu0
        %v543 = vrot.slane %v390, 4
        %vm544 = vcmask 1043456
        %v545 = vsel %vm544, %v350, %v543
        %vm547 = vcmask 130052
        %vm548 = vmor %vm547, %vm544
        %549 = vst.msk [vmem:[%s240] sm:$0xff] %vm548, %v545
        %v552 = vrot.slane %v539, 4
        %v553 = vsel %vm544, %v499, %v552
        %s555 = scalar_lea.vmem %s240, 8
        %556 = vst.msk [vmem:[%s555] sm:$0xff] %vm548, %v553
        %p557 = scmp.lt.s32.totalorder %s20, 1
        %s558 = scalar_select %p557, %s20, 1
        %p559 = scmp.lt.s32.totalorder %s21, 0
        %s560 = scalar_select %p559, %s21, 0
        %s561 = smul.addr %s560, 2
        %s562 = smul.addr %s558, 4
        %s563 = sadd.s32 %s561, %s562
        %s564 = smul.addr %s563, 4
        %s565 = scalar_lea.vmem %s3, %s564
        // Predicated region
        $region41: #{_feature_conversion_impl.1} parent=31 // pred_check
          %p566 = pneg %p118
        $region42: #{_feature_conversion_impl.1} parent=31 // pred_check_branch
          %568 = sbr.rel (%p566) target = $region44
        $region43: #{_feature_conversion_impl.1} parent=31 // pred_region
          _
        $region44: #{_feature_conversion_impl.1} parent=31 // pred_fallthru
          _
      $region32: #{_feature_conversion_impl.1} parent=5 // pred_fallthru
        _
      %p569 = scmp.le.s32.totalorder 2, %s11
      // Predicated region
      $region45: #{_feature_conversion_impl.1} parent=5 // pred_check
        %p570 = pneg %p569
      $region46: #{_feature_conversion_impl.1} parent=5 // pred_check_branch
        %572 = sbr.rel (%p570) target = $region48
      $region47: #{_feature_conversion_impl.1} parent=5 // pred_region
        %s573 = ssub.s32 %s11, 2
        // Predicated region
        $region49: #{_feature_conversion_impl.1} parent=47 // pred_check
          %p574 = pneg %p124
        $region50: #{_feature_conversion_impl.1} parent=47 // pred_check_branch
          %576 = sbr.rel (%p574) target = $region52
        $region51: #{_feature_conversion_impl.1} parent=47 // pred_region
          %p577 = scmp.lt.s32.totalorder %s22, 1
          %s578 = scalar_select %p577, %s22, 1
          %p579 = scmp.lt.s32.totalorder %s23, 0
          %s580 = scalar_select %p579, %s23, 0
          %s581 = smul.addr %s580, 2
          %s582 = smul.addr %s578, 4
          %s583 = sadd.s32 %s581, %s582
          %s584 = smul.addr %s583, 4
          %s585 = scalar_lea.vmem %s3, %s584
        $region52: #{_feature_conversion_impl.1} parent=47 // pred_fallthru
          _
      $region48: #{_feature_conversion_impl.1} parent=5 // pred_fallthru
        _
    $region6: #{_feature_conversion_impl.1} parent=1 // loop_footer
      %s15 = sadd.s32 1, %s11
    $region7: #{_feature_conversion_impl.1} parent=1 // loop_footer_branch
      %10 = sbr.rel target = $region3
    $region8: #{_feature_conversion_impl.1} parent=1 // loop_exit
      _
    %586 = vsyncpa [#allocation3], 1
    %s587 = scalar_lea.sflag [#allocation3], 1
    %588 = vsyncpa %s587, 1
    %589 = vsyncpa [#allocation5], 1

// kernel: _feature_conversion_impl.1
$region0: #{_feature_conversion_impl.1}
  #allocation0 [shape = 'u32[]', space=smem, size = 0x4, offset = 0x4, fixed_abs, tag = 'smem constant byte address 0x4 - core index']
  #allocation1 [shape = 'u32[72,128]{1,0:T(1,128)}', space=vmem, size = 0x9000, scoped, tag = 'internal scratch']
  %s0 = inlined_call_operand.vmem [shape: f32[2,4,256], index: 0, kind: input, shape index: {}]
  %s1 = inlined_call_operand.hbm [shape: f32[256,144], index: 1, kind: input, shape index: {}]
  %s2 = inlined_call_operand.hbm [shape: f32[256,144], index: 2, kind: input, shape index: {}]
  %s3 = inlined_call_operand.vmem [shape: f32[2,2,4,144], index: 3, kind: output, shape index: {}]
  %s4 = sld [smem:[#allocation0]]
  $region53: #{_feature_conversion_impl.1} parent=0
    _
  %s6 = ssub.s32 1, %s4
  %s7 = scalar_select 0, %s6, %s4
  $region1: #{_feature_conversion_impl.1} parent=0
    #allocation2 [shape = 'u8[262144]{0}', space=vmem, size = 0x40000, scoped, tag = 'input window, operand 1, single buffered']
    #allocation3 [shape = 's32[2]{0}', space=sflag, size = 0x8, scoped, tag = 'scoped memory for _feature_conversion_impl.1']
    #allocation4 [shape = 'u8[262144]{0}', space=vmem, size = 0x40000, scoped, tag = 'input window, operand 2, single buffered']
    #allocation5 [shape = 's32[1]{0}', space=sflag, size = 0x4, scoped, tag = 'scoped memory for _feature_conversion_impl.1']
    %8 = vsyncpa [#allocation3], 0
    %9 = vsyncpa [#allocation5], 0
    loop: start=0, step=1, limit=4
    $region2: #{_feature_conversion_impl.1} parent=1 // loop_pre_header
      _
    $region3: #{_feature_conversion_impl.1} parent=1 // loop_header
      %s11 = sphi 0, %s15
      %p12 = scmp.ge.s32.totalorder %s11, 4
      %s18 = sphi 0, %s30
      %s19 = sphi 0, %s26
      %s20 = sphi 0, %s18
      %s21 = sphi 0, %s19
      %s22 = sphi 0, %s20
      %s23 = sphi 0, %s21
      %s35 = sphi 0, %s37
      %s38 = sphi 0, %s35
      %s39 = sphi 0, %s38
      %s55 = sphi 0, %s39
      %s59 = sphi 0, %s59
      %s61 = sphi 0, %s59
      %s62 = sphi 0, %s61
      %s76 = sphi 0, %s62
      %s80 = sphi 0, %s80
      %s82 = sphi 0, %s80
      %s83 = sphi 0, %s82
      %s97 = sphi 0, %s83
      %s105 = sphi 0, %s107
      %s108 = sphi 0, %s105
      %s109 = sphi 0, %s108
      %s125 = sphi 0, %s109
    $region4: #{_feature_conversion_impl.1} parent=1 // loop_header_branch
      %14 = sbr.rel (%p12) target = $region8
    $region5: #{_feature_conversion_impl.1} parent=1 // loop_body
      %s16 = ssub.s32 %s11, 1
      %s17 = ssub.s32 %s11, 2
      %s24 = sadd.s32 1, %s19
      %p25 = scmp.ge.s32.totalorder %s24, 1
      %s26 = scalar_select %p25, 0, %s24
      %s27 = sadd.s32 1, %s18
      %s28 = scalar_select %p25, %s27, %s18
      %p29 = scmp.ge.s32.totalorder %s28, 2
      %s30 = scalar_select %p29, 0, %s28
      %s31 = ssub.s32 %s18, %s30
      %s32 = ssub.s32 %s19, %s26
      %s33 = sor.u32 %s31, %s32
      %p34 = scmp.eq.s32.totalorder %s33, 0
      %s36 = sadd.s32 %s35, 1
      %s37 = scalar_select %p34, %s35, %s36
      %p40 = pneg %p34
      %p41 = scmp.eq.s32.totalorder %s11, 1
      %p42 = por %p40, %p41
      %p43 = scmp.ne.s32.totalorder %s35, %s38
      %p44 = scmp.eq.s32.totalorder %s11, 0
      %p45 = por %p43, %p44
      %p46 = scmp.ne.s32.totalorder %s35, %s38
      %p47 = scmp.eq.s32.totalorder %s16, 1
      %p48 = por %p46, %p47
      %p49 = scmp.ne.s32.totalorder %s38, %s39
      %p50 = scmp.eq.s32.totalorder %s16, 0
      %p51 = por %p49, %p50
      %p52 = scmp.ne.s32.totalorder %s38, %s39
      %p53 = scmp.eq.s32.totalorder %s17, 1
      %p54 = por %p52, %p53
      %p56 = scmp.ne.s32.totalorder %s39, %s55
      %p57 = scmp.eq.s32.totalorder %s17, 0
      %p58 = por %p56, %p57
      %s60 = sadd.s32 %s59, 1
      %p63 = scmp.eq.s32.totalorder %s11, 1
      %p64 = scmp.ne.s32.totalorder %s59, %s61
      %p65 = scmp.eq.s32.totalorder %s11, 0
      %p66 = por %p64, %p65
      %p67 = scmp.ne.s32.totalorder %s59, %s61
      %p68 = scmp.eq.s32.totalorder %s16, 1
      %p69 = por %p67, %p68
      %p70 = scmp.ne.s32.totalorder %s61, %s62
      %p71 = scmp.eq.s32.totalorder %s16, 0
      %p72 = por %p70, %p71
      %p73 = scmp.ne.s32.totalorder %s61, %s62
      %p74 = scmp.eq.s32.totalorder %s17, 1
      %p75 = por %p73, %p74
      %p77 = scmp.ne.s32.totalorder %s62, %s76
      %p78 = scmp.eq.s32.totalorder %s17, 0
      %p79 = por %p77, %p78
      %s81 = sadd.s32 %s80, 1
      %p84 = scmp.eq.s32.totalorder %s11, 1
      %p85 = scmp.ne.s32.totalorder %s80, %s82
      %p86 = scmp.eq.s32.totalorder %s11, 0
      %p87 = por %p85, %p86
      %p88 = scmp.ne.s32.totalorder %s80, %s82
      %p89 = scmp.eq.s32.totalorder %s16, 1
      %p90 = por %p88, %p89
      %p91 = scmp.ne.s32.totalorder %s82, %s83
      %p92 = scmp.eq.s32.totalorder %s16, 0
      %p93 = por %p91, %p92
      %p94 = scmp.ne.s32.totalorder %s82, %s83
      %p95 = scmp.eq.s32.totalorder %s17, 1
      %p96 = por %p94, %p95
      %p98 = scmp.ne.s32.totalorder %s83, %s97
      %p99 = scmp.eq.s32.totalorder %s17, 0
      %p100 = por %p98, %p99
      %s101 = ssub.s32 %s18, %s30
      %s102 = ssub.s32 %s19, %s26
      %s103 = sor.u32 %s101, %s102
      %p104 = scmp.eq.s32.totalorder %s103, 0
      %s106 = sadd.s32 %s105, 1
      %s107 = scalar_select %p104, %s105, %s106
      %p110 = pneg %p104
      %p111 = scmp.eq.s32.totalorder %s11, 1
      %p112 = por %p110, %p111
      %p113 = scmp.ne.s32.totalorder %s105, %s108
      %p114 = scmp.eq.s32.totalorder %s11, 0
      %p115 = por %p113, %p114
      %p116 = scmp.ne.s32.totalorder %s105, %s108
      %p117 = scmp.eq.s32.totalorder %s16, 1
      %p118 = por %p116, %p117
      %p119 = scmp.ne.s32.totalorder %s108, %s109
      %p120 = scmp.eq.s32.totalorder %s16, 0
      %p121 = por %p119, %p120
      %p122 = scmp.ne.s32.totalorder %s108, %s109
      %p123 = scmp.eq.s32.totalorder %s17, 1
      %p124 = por %p122, %p123
      %p126 = scmp.ne.s32.totalorder %s109, %s125
      %p127 = scmp.eq.s32.totalorder %s17, 0
      %p128 = por %p126, %p127
      %p129 = scmp.le.s32.totalorder 1, %s11
      %p130 = scmp.lt.s32.totalorder %s11, 3
      %p131 = pnand %p129, %p130
      %p132 = pneg %p131
      // Predicated region
      $region9: #{_feature_conversion_impl.1} parent=5 // pred_check
        _
      $region10: #{_feature_conversion_impl.1} parent=5 // pred_check_branch
        %134 = sbr.rel (%p131) target = $region12
      $region11: #{_feature_conversion_impl.1} parent=5 // pred_region
        %s135 = ssub.s32 %s11, 1
        // Predicated region
        $region13: #{_feature_conversion_impl.1} parent=11 // pred_check
          %p136 = pneg %p72
        $region14: #{_feature_conversion_impl.1} parent=11 // pred_check_branch
          %138 = sbr.rel (%p136) target = $region16
        $region15: #{_feature_conversion_impl.1} parent=11 // pred_region
          %140 = vsyncadd [#allocation3], 0
          %s141 = sshll.u32 %s1, 4
          %s142 = int_to_ptr.hbm [resolvable:$true] %s141
          %s143 = sshll.u32 [#allocation2], 4
          %s144 = int_to_ptr.vmem [resolvable:$true] %s143
          %149 = dma.hbm_to_vmem [thread:$0]  %s142, 8192, %s144, [#allocation3], 256, 256, 16
        $region16: #{_feature_conversion_impl.1} parent=11 // pred_fallthru
          _
        // Predicated region
        $region17: #{_feature_conversion_impl.1} parent=11 // pred_check
          %p150 = pneg %p93
        $region18: #{_feature_conversion_impl.1} parent=11 // pred_check_branch
          %152 = sbr.rel (%p150) target = $region20
        $region19: #{_feature_conversion_impl.1} parent=11 // pred_region
          %154 = vsyncadd [#allocation5], 0
          %s155 = sshll.u32 %s2, 4
          %s156 = int_to_ptr.hbm [resolvable:$true] %s155
          %s157 = sshll.u32 [#allocation4], 4
          %s158 = int_to_ptr.vmem [resolvable:$true] %s157
          %163 = dma.hbm_to_vmem [thread:$0]  %s156, 8192, %s158, [#allocation5], 256, 256, 16
        $region20: #{_feature_conversion_impl.1} parent=11 // pred_fallthru
          _
      $region12: #{_feature_conversion_impl.1} parent=5 // pred_fallthru
        _
      %p164 = scmp.lt.s32.totalorder %s11, 2
      // Predicated region
      $region21: #{_feature_conversion_impl.1} parent=5 // pred_check
        %p165 = pneg %p164
      $region22: #{_feature_conversion_impl.1} parent=5 // pred_check_branch
        %167 = sbr.rel (%p165) target = $region24
      $region23: #{_feature_conversion_impl.1} parent=5 // pred_region
        // Predicated region
        $region25: #{_feature_conversion_impl.1} parent=23 // pred_check
          %p168 = pneg %p45
        $region26: #{_feature_conversion_impl.1} parent=23 // pred_check_branch
          %170 = sbr.rel (%p168) target = $region28
        $region27: #{_feature_conversion_impl.1} parent=23 // pred_region
          %p171 = scmp.lt.s32.totalorder %s18, 1
          %s172 = scalar_select %p171, %s18, 1
          %p173 = scmp.lt.s32.totalorder %s19, 0
          %s174 = scalar_select %p173, %s19, 0
          %s175 = smul.addr %s174, 2
          %s176 = smul.addr %s172, 2
          %s177 = sadd.s32 %s175, %s176
          %s178 = smul.addr %s177, 4
          %s179 = scalar_lea.vmem %s0, %s178
        $region28: #{_feature_conversion_impl.1} parent=23 // pred_fallthru
          _
      $region24: #{_feature_conversion_impl.1} parent=5 // pred_fallthru
        _
      %p180 = scmp.le.s32.totalorder 1, %s11
      %p181 = scmp.lt.s32.totalorder %s11, 3
      %p182 = pnand %p180, %p181
      %p183 = pneg %p182
      // Predicated region
      $region29: #{_feature_conversion_impl.1} parent=5 // pred_check
        _
      $region30: #{_feature_conversion_impl.1} parent=5 // pred_check_branch
        %185 = sbr.rel (%p182) target = $region32
      $region31: #{_feature_conversion_impl.1} parent=5 // pred_region
        %s186 = ssub.s32 %s11, 1
        // Predicated region
        $region33: #{_feature_conversion_impl.1} parent=31 // pred_check
          %p187 = pneg %p72
        $region34: #{_feature_conversion_impl.1} parent=31 // pred_check_branch
          %189 = sbr.rel (%p187) target = $region36
        $region35: #{_feature_conversion_impl.1} parent=31 // pred_region
          %191 = dma.done [#allocation3], 8192
        $region36: #{_feature_conversion_impl.1} parent=31 // pred_fallthru
          _
        // Predicated region
        $region37: #{_feature_conversion_impl.1} parent=31 // pred_check
          %p192 = pneg %p93
        $region38: #{_feature_conversion_impl.1} parent=31 // pred_check_branch
          %194 = sbr.rel (%p192) target = $region40
        $region39: #{_feature_conversion_impl.1} parent=31 // pred_region
          %196 = dma.done [#allocation5], 8192
        $region40: #{_feature_conversion_impl.1} parent=31 // pred_fallthru
          _
        %p197 = scmp.lt.s32.totalorder %s20, 1
        %s198 = scalar_select %p197, %s20, 1
        %p199 = scmp.lt.s32.totalorder %s21, 0
        %s200 = scalar_select %p199, %s21, 0
        %s201 = smul.addr %s200, 2
        %s202 = smul.addr %s198, 2
        %s203 = sadd.s32 %s201, %s202
        %s204 = smul.addr %s203, 4
        %s205 = scalar_lea.vmem %s0, %s204
        %p206 = pneg %p51
        %p207 = pneg %p48
        %p208 = pneg %p72
        %p209 = pneg %p69
        %p210 = pneg %p93
        %p211 = pneg %p90
        %p212 = pneg %p121
        %p213 = pneg %p118
        %p214 = scmp.lt.s32.totalorder %s20, 1
        %s215 = scalar_select %p214, %s20, 1
        %p216 = scmp.lt.s32.totalorder %s21, 0
        %s217 = scalar_select %p216, %s21, 0
        %s218 = smul.addr %s217, 2
        %s219 = smul.addr %s215, 4
        %s220 = sadd.s32 %s218, %s219
        %s221 = smul.addr %s220, 4
        %s222 = scalar_lea.vmem %s3, %s221
        %p223 = scmp.lt.s32.totalorder %s20, 1
        %s224 = scalar_select %p223, %s20, 1
        %p225 = scmp.lt.s32.totalorder %s21, 0
        %s226 = scalar_select %p225, %s21, 0
        %s227 = smul.addr %s226, 2
        %s228 = smul.addr %s224, 2
        %s229 = sadd.s32 %s227, %s228
        %s230 = smul.addr %s229, 4
        %s231 = scalar_lea.vmem %s0, %s230
        %p232 = scmp.lt.s32.totalorder %s20, 1
        %s233 = scalar_select %p232, %s20, 1
        %p234 = scmp.lt.s32.totalorder %s21, 0
        %s235 = scalar_select %p234, %s21, 0
        %s236 = smul.addr %s235, 2
        %s237 = smul.addr %s233, 4
        %s238 = sadd.s32 %s236, %s237
        %s239 = smul.addr %s238, 4
        %s240 = scalar_lea.vmem %s3, %s239
        %v241 = vld [vmem:[%s231] sm:$0xff]
        %v242 = vld [vmem:[#allocation2] sm:$0xff]
        %v243 = vld [vmem:[#allocation2 + $0x8] sm:$0xff]
        %v244 = vld [vmem:[#allocation2 + $0x10] sm:$0xff]
        %v245 = vld [vmem:[#allocation2 + $0x18] sm:$0xff]
        %v246 = vld [vmem:[#allocation2 + $0x20] sm:$0xff]
        %v247 = vld [vmem:[#allocation2 + $0x28] sm:$0xff]
        %v248 = vld [vmem:[#allocation2 + $0x30] sm:$0xff]
        %v249 = vld [vmem:[#allocation2 + $0x38] sm:$0xff]
        %v250 = vld [vmem:[#allocation2 + $0x40] sm:$0xff]
        %v251 = vld [vmem:[#allocation2 + $0x48] sm:$0xff]
        %v252 = vld [vmem:[#allocation2 + $0x50] sm:$0xff]
        %v253 = vld [vmem:[#allocation2 + $0x58] sm:$0xff]
        %v254 = vld [vmem:[#allocation2 + $0x60] sm:$0xff]
        %v255 = vld [vmem:[#allocation2 + $0x68] sm:$0xff]
        %v256 = vld [vmem:[#allocation2 + $0x70] sm:$0xff]
        %v257 = vld [vmem:[#allocation2 + $0x78] sm:$0xff]
        %v258 = vld [vmem:[#allocation2 + $0x80] sm:$0xff]
        %v259 = vld [vmem:[#allocation2 + $0x88] sm:$0xff]
        %v260 = vld [vmem:[#allocation2 + $0x90] sm:$0xff]
        %v261 = vld [vmem:[#allocation2 + $0x98] sm:$0xff]
        %v262 = vld [vmem:[#allocation2 + $0xa0] sm:$0xff]
        %v263 = vld [vmem:[#allocation2 + $0xa8] sm:$0xff]
        %v264 = vld [vmem:[#allocation2 + $0xb0] sm:$0xff]
        %v265 = vld [vmem:[#allocation2 + $0xb8] sm:$0xff]
        %v266 = vld [vmem:[#allocation2 + $0xc0] sm:$0xff]
        %v267 = vld [vmem:[#allocation2 + $0xc8] sm:$0xff]
        %v268 = vld [vmem:[#allocation2 + $0xd0] sm:$0xff]
        %v269 = vld [vmem:[#allocation2 + $0xd8] sm:$0xff]
        %v270 = vld [vmem:[#allocation2 + $0xe0] sm:$0xff]
        %v271 = vld [vmem:[#allocation2 + $0xe8] sm:$0xff]
        %v272 = vld [vmem:[#allocation2 + $0xf0] sm:$0xff]
        %v273 = vld [vmem:[#allocation2 + $0xf8] sm:$0xff]
        %v274 = vld [vmem:[#allocation2 + $0x100] sm:$0xff]
        %v275 = vld [vmem:[#allocation2 + $0x108] sm:$0xff]
        %v276 = vld [vmem:[#allocation2 + $0x110] sm:$0xff]
        %v277 = vld [vmem:[#allocation2 + $0x118] sm:$0xff]
        %v278 = vld [vmem:[#allocation2 + $0x120] sm:$0xff]
        %v279 = vld [vmem:[#allocation2 + $0x128] sm:$0xff]
        %v280 = vld [vmem:[#allocation2 + $0x130] sm:$0xff]
        %v281 = vld [vmem:[#allocation2 + $0x138] sm:$0xff]
        %v282 = vld [vmem:[#allocation2 + $0x140] sm:$0xff]
        %v283 = vld [vmem:[#allocation2 + $0x148] sm:$0xff]
        %v284 = vld [vmem:[#allocation2 + $0x150] sm:$0xff]
        %v285 = vld [vmem:[#allocation2 + $0x158] sm:$0xff]
        %v286 = vld [vmem:[#allocation2 + $0x160] sm:$0xff]
        %v287 = vld [vmem:[#allocation2 + $0x168] sm:$0xff]
        %v288 = vld [vmem:[#allocation2 + $0x170] sm:$0xff]
        %v289 = vld [vmem:[#allocation2 + $0x178] sm:$0xff]
        %v290 = vld [vmem:[#allocation2 + $0x180] sm:$0xff]
        %v291 = vld [vmem:[#allocation2 + $0x188] sm:$0xff]
        %v292 = vld [vmem:[#allocation2 + $0x190] sm:$0xff]
        %v293 = vld [vmem:[#allocation2 + $0x198] sm:$0xff]
        %v294 = vld [vmem:[#allocation2 + $0x1a0] sm:$0xff]
        %v295 = vld [vmem:[#allocation2 + $0x1a8] sm:$0xff]
        %v296 = vld [vmem:[#allocation2 + $0x1b0] sm:$0xff]
        %v297 = vld [vmem:[#allocation2 + $0x1b8] sm:$0xff]
        %v298 = vld [vmem:[#allocation2 + $0x1c0] sm:$0xff]
        %v299 = vld [vmem:[#allocation2 + $0x1c8] sm:$0xff]
        %v300 = vld [vmem:[#allocation2 + $0x1d0] sm:$0xff]
        %v301 = vld [vmem:[#allocation2 + $0x1d8] sm:$0xff]
        %v302 = vld [vmem:[#allocation2 + $0x1e0] sm:$0xff]
        %v303 = vld [vmem:[#allocation2 + $0x1e8] sm:$0xff]
        %v304 = vld [vmem:[#allocation2 + $0x1f0] sm:$0xff]
        %v305 = vld [vmem:[#allocation2 + $0x1f8] sm:$0xff]
        %307 = vst [vmem:[#allocation1] ss:$2 sm:$0xff] %v241
        %v308 = vld.sshfl [vmem:[#allocation1] sm:$0xff pattern:$0x75316420]
        %v309 = vld.sshfl [vmem:[#allocation1 + $0x8] sm:$0xff pattern:$0x75316420]
        %312 = vmatpush.msra.mxu0 %v272
        %313 = vmatpush.msra.mxu0 %v270
        %314 = vmatpush.msra.mxu0 %v268
        %315 = vmatpush.msra.mxu0 %v266
        %316 = vmatpush.msra.mxu0 %v264
        %317 = vmatpush.msra.mxu0 %v262
        %318 = vmatpush.msra.mxu0 %v260
        %319 = vmatpush.msra.mxu0 %v258
        %320 = vmatpush.msra.mxu0 %v256
        %321 = vmatpush.msra.mxu0 %v254
        %322 = vmatpush.msra.mxu0 %v252
        %323 = vmatpush.msra.mxu0 %v250
        %324 = vmatpush.msra.mxu0 %v248
        %325 = vmatpush.msra.mxu0 %v246
        %326 = vmatpush.msra.mxu0 %v244
        %327 = vmatpush.msra.mxu0 %v242
        %328 = vmatmul.f32.gmra.mxu0 %v308
        %v329 = vpop.f32.mrf.mxu0
        %v330 = vadd.f32 0.0, %v329
        %331 = vdwg.mxu0
        %332 = vmatpush.msra.mxu0 %v304
        %333 = vmatpush.msra.mxu0 %v302
        %334 = vmatpush.msra.mxu0 %v300
        %335 = vmatpush.msra.mxu0 %v298
        %336 = vmatpush.msra.mxu0 %v296
        %337 = vmatpush.msra.mxu0 %v294
        %338 = vmatpush.msra.mxu0 %v292
        %339 = vmatpush.msra.mxu0 %v290
        %340 = vmatpush.msra.mxu0 %v288
        %341 = vmatpush.msra.mxu0 %v286
        %342 = vmatpush.msra.mxu0 %v284
        %343 = vmatpush.msra.mxu0 %v282
        %344 = vmatpush.msra.mxu0 %v280
        %345 = vmatpush.msra.mxu0 %v278
        %346 = vmatpush.msra.mxu0 %v276
        %347 = vmatpush.msra.mxu0 %v274
        %348 = vmatmul.f32.gmra.mxu0 %v309
        %v349 = vpop.f32.mrf.mxu0
        %v350 = vadd.f32 %v330, %v349
        %351 = vdwg.mxu0
        %352 = vmatpush.msra.mxu0 %v273
        %353 = vmatpush.msra.mxu0 %v271
        %354 = vmatpush.msra.mxu0 %v269
        %355 = vmatpush.msra.mxu0 %v267
        %356 = vmatpush.msra.mxu0 %v265
        %357 = vmatpush.msra.mxu0 %v263
        %358 = vmatpush.msra.mxu0 %v261
        %359 = vmatpush.msra.mxu0 %v259
        %360 = vmatpush.msra.mxu0 %v257
        %361 = vmatpush.msra.mxu0 %v255
        %362 = vmatpush.msra.mxu0 %v253
        %363 = vmatpush.msra.mxu0 %v251
        %364 = vmatpush.msra.mxu0 %v249
        %365 = vmatpush.msra.mxu0 %v247
        %366 = vmatpush.msra.mxu0 %v245
        %367 = vmatpush.msra.mxu0 %v243
        %368 = vmatmul.f32.gmra.mxu0 %v308
        %v369 = vpop.f32.mrf.mxu0
        %v370 = vadd.f32 0.0, %v369
        %371 = vdwg.mxu0
        %372 = vmatpush.msra.mxu0 %v305
        %373 = vmatpush.msra.mxu0 %v303
        %374 = vmatpush.msra.mxu0 %v301
        %375 = vmatpush.msra.mxu0 %v299
        %376 = vmatpush.msra.mxu0 %v297
        %377 = vmatpush.msra.mxu0 %v295
        %378 = vmatpush.msra.mxu0 %v293
        %379 = vmatpush.msra.mxu0 %v291
        %380 = vmatpush.msra.mxu0 %v289
        %381 = vmatpush.msra.mxu0 %v287
        %382 = vmatpush.msra.mxu0 %v285
        %383 = vmatpush.msra.mxu0 %v283
        %384 = vmatpush.msra.mxu0 %v281
        %385 = vmatpush.msra.mxu0 %v279
        %386 = vmatpush.msra.mxu0 %v277
        %387 = vmatpush.msra.mxu0 %v275
        %388 = vmatmul.f32.gmra.mxu0 %v309
        %v389 = vpop.f32.mrf.mxu0
        %v390 = vadd.f32 %v370, %v389
        %391 = vdwg.mxu0
        %v392 = vld [vmem:[#allocation4] sm:$0xff]
        %v393 = vld [vmem:[#allocation4 + $0x8] sm:$0xff]
        %v394 = vld [vmem:[#allocation4 + $0x10] sm:$0xff]
        %v395 = vld [vmem:[#allocation4 + $0x18] sm:$0xff]
        %v396 = vld [vmem:[#allocation4 + $0x20] sm:$0xff]
        %v397 = vld [vmem:[#allocation4 + $0x28] sm:$0xff]
        %v398 = vld [vmem:[#allocation4 + $0x30] sm:$0xff]
        %v399 = vld [vmem:[#allocation4 + $0x38] sm:$0xff]
        %v400 = vld [vmem:[#allocation4 + $0x40] sm:$0xff]
        %v401 = vld [vmem:[#allocation4 + $0x48] sm:$0xff]
        %v402 = vld [vmem:[#allocation4 + $0x50] sm:$0xff]
        %v403 = vld [vmem:[#allocation4 + $0x58] sm:$0xff]
        %v404 = vld [vmem:[#allocation4 + $0x60] sm:$0xff]
        %v405 = vld [vmem:[#allocation4 + $0x68] sm:$0xff]
        %v406 = vld [vmem:[#allocation4 + $0x70] sm:$0xff]
        %v407 = vld [vmem:[#allocation4 + $0x78] sm:$0xff]
        %v408 = vld [vmem:[#allocation4 + $0x80] sm:$0xff]
        %v409 = vld [vmem:[#allocation4 + $0x88] sm:$0xff]
        %v410 = vld [vmem:[#allocation4 + $0x90] sm:$0xff]
        %v411 = vld [vmem:[#allocation4 + $0x98] sm:$0xff]
        %v412 = vld [vmem:[#allocation4 + $0xa0] sm:$0xff]
        %v413 = vld [vmem:[#allocation4 + $0xa8] sm:$0xff]
        %v414 = vld [vmem:[#allocation4 + $0xb0] sm:$0xff]
        %v415 = vld [vmem:[#allocation4 + $0xb8] sm:$0xff]
        %v416 = vld [vmem:[#allocation4 + $0xc0] sm:$0xff]
        %v417 = vld [vmem:[#allocation4 + $0xc8] sm:$0xff]
        %v418 = vld [vmem:[#allocation4 + $0xd0] sm:$0xff]
        %v419 = vld [vmem:[#allocation4 + $0xd8] sm:$0xff]
        %v420 = vld [vmem:[#allocation4 + $0xe0] sm:$0xff]
        %v421 = vld [vmem:[#allocation4 + $0xe8] sm:$0xff]
        %v422 = vld [vmem:[#allocation4 + $0xf0] sm:$0xff]
        %v423 = vld [vmem:[#allocation4 + $0xf8] sm:$0xff]
        %v424 = vld [vmem:[#allocation4 + $0x100] sm:$0xff]
        %v425 = vld [vmem:[#allocation4 + $0x108] sm:$0xff]
        %v426 = vld [vmem:[#allocation4 + $0x110] sm:$0xff]
        %v427 = vld [vmem:[#allocation4 + $0x118] sm:$0xff]
        %v428 = vld [vmem:[#allocation4 + $0x120] sm:$0xff]
        %v429 = vld [vmem:[#allocation4 + $0x128] sm:$0xff]
        %v430 = vld [vmem:[#allocation4 + $0x130] sm:$0xff]
        %v431 = vld [vmem:[#allocation4 + $0x138] sm:$0xff]
        %v432 = vld [vmem:[#allocation4 + $0x140] sm:$0xff]
        %v433 = vld [vmem:[#allocation4 + $0x148] sm:$0xff]
        %v434 = vld [vmem:[#allocation4 + $0x150] sm:$0xff]
        %v435 = vld [vmem:[#allocation4 + $0x158] sm:$0xff]
        %v436 = vld [vmem:[#allocation4 + $0x160] sm:$0xff]
        %v437 = vld [vmem:[#allocation4 + $0x168] sm:$0xff]
        %v438 = vld [vmem:[#allocation4 + $0x170] sm:$0xff]
        %v439 = vld [vmem:[#allocation4 + $0x178] sm:$0xff]
        %v440 = vld [vmem:[#allocation4 + $0x180] sm:$0xff]
        %v441 = vld [vmem:[#allocation4 + $0x188] sm:$0xff]
        %v442 = vld [vmem:[#allocation4 + $0x190] sm:$0xff]
        %v443 = vld [vmem:[#allocation4 + $0x198] sm:$0xff]
        %v444 = vld [vmem:[#allocation4 + $0x1a0] sm:$0xff]
        %v445 = vld [vmem:[#allocation4 + $0x1a8] sm:$0xff]
        %v446 = vld [vmem:[#allocation4 + $0x1b0] sm:$0xff]
        %v447 = vld [vmem:[#allocation4 + $0x1b8] sm:$0xff]
        %v448 = vld [vmem:[#allocation4 + $0x1c0] sm:$0xff]
        %v449 = vld [vmem:[#allocation4 + $0x1c8] sm:$0xff]
        %v450 = vld [vmem:[#allocation4 + $0x1d0] sm:$0xff]
        %v451 = vld [vmem:[#allocation4 + $0x1d8] sm:$0xff]
        %v452 = vld [vmem:[#allocation4 + $0x1e0] sm:$0xff]
        %v453 = vld [vmem:[#allocation4 + $0x1e8] sm:$0xff]
        %v454 = vld [vmem:[#allocation4 + $0x1f0] sm:$0xff]
        %v455 = vld [vmem:[#allocation4 + $0x1f8] sm:$0xff]
        %456 = vst [vmem:[#allocation1] ss:$2 sm:$0xff] %v241
        %v457 = vld.sshfl [vmem:[#allocation1] sm:$0xff pattern:$0x75316420]
        %v458 = vld.sshfl [vmem:[#allocation1 + $0x8] sm:$0xff pattern:$0x75316420]
        %461 = vmatpush.msra.mxu0 %v422
        %462 = vmatpush.msra.mxu0 %v420
        %463 = vmatpush.msra.mxu0 %v418
        %464 = vmatpush.msra.mxu0 %v416
        %465 = vmatpush.msra.mxu0 %v414
        %466 = vmatpush.msra.mxu0 %v412
        %467 = vmatpush.msra.mxu0 %v410
        %468 = vmatpush.msra.mxu0 %v408
        %469 = vmatpush.msra.mxu0 %v406
        %470 = vmatpush.msra.mxu0 %v404
        %471 = vmatpush.msra.mxu0 %v402
        %472 = vmatpush.msra.mxu0 %v400
        %473 = vmatpush.msra.mxu0 %v398
        %474 = vmatpush.msra.mxu0 %v396
        %475 = vmatpush.msra.mxu0 %v394
        %476 = vmatpush.msra.mxu0 %v392
        %477 = vmatmul.f32.gmra.mxu0 %v457
        %v478 = vpop.f32.mrf.mxu0
        %v479 = vadd.f32 0.0, %v478
        %480 = vdwg.mxu0
        %481 = vmatpush.msra.mxu0 %v454
        %482 = vmatpush.msra.mxu0 %v452
        %483 = vmatpush.msra.mxu0 %v450
        %484 = vmatpush.msra.mxu0 %v448
        %485 = vmatpush.msra.mxu0 %v446
        %486 = vmatpush.msra.mxu0 %v444
        %487 = vmatpush.msra.mxu0 %v442
        %488 = vmatpush.msra.mxu0 %v440
        %489 = vmatpush.msra.mxu0 %v438
        %490 = vmatpush.msra.mxu0 %v436
        %491 = vmatpush.msra.mxu0 %v434
        %492 = vmatpush.msra.mxu0 %v432
        %493 = vmatpush.msra.mxu0 %v430
        %494 = vmatpush.msra.mxu0 %v428
        %495 = vmatpush.msra.mxu0 %v426
        %496 = vmatpush.msra.mxu0 %v424
        %497 = vmatmul.f32.gmra.mxu0 %v458
        %v498 = vpop.f32.mrf.mxu0
        %v499 = vadd.f32 %v479, %v498
        %500 = vdwg.mxu0
        %501 = vmatpush.msra.mxu0 %v423
        %502 = vmatpush.msra.mxu0 %v421
        %503 = vmatpush.msra.mxu0 %v419
        %504 = vmatpush.msra.mxu0 %v417
        %505 = vmatpush.msra.mxu0 %v415
        %506 = vmatpush.msra.mxu0 %v413
        %507 = vmatpush.msra.mxu0 %v411
        %508 = vmatpush.msra.mxu0 %v409
        %509 = vmatpush.msra.mxu0 %v407
        %510 = vmatpush.msra.mxu0 %v405
        %511 = vmatpush.msra.mxu0 %v403
        %512 = vmatpush.msra.mxu0 %v401
        %513 = vmatpush.msra.mxu0 %v399
        %514 = vmatpush.msra.mxu0 %v397
        %515 = vmatpush.msra.mxu0 %v395
        %516 = vmatpush.msra.mxu0 %v393
        %517 = vmatmul.f32.gmra.mxu0 %v457
        %v518 = vpop.f32.mrf.mxu0
        %v519 = vadd.f32 0.0, %v518
        %520 = vdwg.mxu0
        %521 = vmatpush.msra.mxu0 %v455
        %522 = vmatpush.msra.mxu0 %v453
        %523 = vmatpush.msra.mxu0 %v451
        %524 = vmatpush.msra.mxu0 %v449
        %525 = vmatpush.msra.mxu0 %v447
        %526 = vmatpush.msra.mxu0 %v445
        %527 = vmatpush.msra.mxu0 %v443
        %528 = vmatpush.msra.mxu0 %v441
        %529 = vmatpush.msra.mxu0 %v439
        %530 = vmatpush.msra.mxu0 %v437
        %531 = vmatpush.msra.mxu0 %v435
        %532 = vmatpush.msra.mxu0 %v433
        %533 = vmatpush.msra.mxu0 %v431
        %534 = vmatpush.msra.mxu0 %v429
        %535 = vmatpush.msra.mxu0 %v427
        %536 = vmatpush.msra.mxu0 %v425
        %537 = vmatmul.f32.gmra.mxu0 %v458
        %v538 = vpop.f32.mrf.mxu0
        %v539 = vadd.f32 %v519, %v538
        %540 = vdwg.mxu0
        %v543 = vrot.slane %v390, 4
        %vm544 = vcmask 1043456
        %v545 = vsel %vm544, %v350, %v543
        %vm547 = vcmask 130052
        %vm548 = vmor %vm547, %vm544
        %549 = vst.msk [vmem:[%s240] sm:$0xff] %vm548, %v545
        %v552 = vrot.slane %v539, 4
        %v553 = vsel %vm544, %v499, %v552
        %s555 = scalar_lea.vmem %s240, 8
        %556 = vst.msk [vmem:[%s555] sm:$0xff] %vm548, %v553
        %p557 = scmp.lt.s32.totalorder %s20, 1
        %s558 = scalar_select %p557, %s20, 1
        %p559 = scmp.lt.s32.totalorder %s21, 0
        %s560 = scalar_select %p559, %s21, 0
        %s561 = smul.addr %s560, 2
        %s562 = smul.addr %s558, 4
        %s563 = sadd.s32 %s561, %s562
        %s564 = smul.addr %s563, 4
        %s565 = scalar_lea.vmem %s3, %s564
        // Predicated region
        $region41: #{_feature_conversion_impl.1} parent=31 // pred_check
          %p566 = pneg %p118
        $region42: #{_feature_conversion_impl.1} parent=31 // pred_check_branch
          %568 = sbr.rel (%p566) target = $region44
        $region43: #{_feature_conversion_impl.1} parent=31 // pred_region
          _
        $region44: #{_feature_conversion_impl.1} parent=31 // pred_fallthru
          _
      $region32: #{_feature_conversion_impl.1} parent=5 // pred_fallthru
        _
      %p569 = scmp.le.s32.totalorder 2, %s11
      // Predicated region
      $region45: #{_feature_conversion_impl.1} parent=5 // pred_check
        %p570 = pneg %p569
      $region46: #{_feature_conversion_impl.1} parent=5 // pred_check_branch
        %572 = sbr.rel (%p570) target = $region48
      $region47: #{_feature_conversion_impl.1} parent=5 // pred_region
        %s573 = ssub.s32 %s11, 2
        // Predicated region
        $region49: #{_feature_conversion_impl.1} parent=47 // pred_check
          %p574 = pneg %p124
        $region50: #{_feature_conversion_impl.1} parent=47 // pred_check_branch
          %576 = sbr.rel (%p574) target = $region52
        $region51: #{_feature_conversion_impl.1} parent=47 // pred_region
          %p577 = scmp.lt.s32.totalorder %s22, 1
          %s578 = scalar_select %p577, %s22, 1
          %p579 = scmp.lt.s32.totalorder %s23, 0
          %s580 = scalar_select %p579, %s23, 0
          %s581 = smul.addr %s580, 2
          %s582 = smul.addr %s578, 4
          %s583 = sadd.s32 %s581, %s582
          %s584 = smul.addr %s583, 4
          %s585 = scalar_lea.vmem %s3, %s584
        $region52: #{_feature_conversion_impl.1} parent=47 // pred_fallthru
          _
      $region48: #{_feature_conversion_impl.1} parent=5 // pred_fallthru
        _
    $region6: #{_feature_conversion_impl.1} parent=1 // loop_footer
      %s15 = sadd.s32 1, %s11
    $region7: #{_feature_conversion_impl.1} parent=1 // loop_footer_branch
      %10 = sbr.rel target = $region3
    $region8: #{_feature_conversion_impl.1} parent=1 // loop_exit
      _
    %586 = vsyncpa [#allocation3], 1
    %s587 = scalar_lea.sflag [#allocation3], 1
    %588 = vsyncpa %s587, 1
    %589 = vsyncpa [#allocation5], 1

</llo_original>
